<compile_context>
chip_gen: v6e
topology: v6e:2x2x1
jax: 0.10.0
libtpu: 0.0.40
codegen_flags: <defaults>
</compile_context>

<pallas_src>
import functools

import jax
import jax.numpy as jnp
from jax.experimental import pallas as pl
from jax.experimental.pallas import tpu as pltpu

EPS = 1e-5


# ----------------------------- sizing helpers ------------------------------

def _vmem_budget_bytes():
    """~3/4 of physical VMEM (~96 MiB on v5e/v6e, ~48 MiB on v7x)."""
    try:
        cap = int(pltpu.get_tpu_info().vmem_capacity_bytes)
    except Exception:
        cap = 64 * 1024 * 1024          # conservative (v7x-sized) fallback
    if cap <= 0:
        cap = 64 * 1024 * 1024
    return (cap * 3) // 4


def _pick_row_block(H2, W2, cin, cmid, cout, budget):
    """Largest divisor of H2 whose per-grid-step VMEM estimate fits `budget`."""
    def est(th):
        f32, bf16 = 4, 2
        # stage A: 2x (input strip + y1 strip), f32 halo pad, f32 acc, weights.
        a = (2 * (th * W2 * 4 * cin * f32 + th * W2 * cmid * bf16)
             + (th + 2) * (W2 + 2) * cin * f32 + th * W2 * cmid * f32
             + 2 * 9 * cin * cmid * bf16)
        # stage B: 2x (y1 strip + y2 strip), f32 halo pad, f32 acc, weights.
        b = (2 * (th * W2 * cmid * bf16 + th * W2 * cout * bf16)
             + (th + 2) * (W2 + 2) * cmid * f32 + th * W2 * cout * f32
             + 2 * 9 * cmid * cout * bf16)
        return max(a, b) + (2 << 20)

    th = 1
    for cand in range(1, H2 + 1):
        if H2 % cand == 0 and est(cand) <= budget:
            th = cand
    return th


# ------------------------------ kernel bodies -------------------------------

def _conv3x3(pad_ref, w_ref, b_ref, TH, W, C, mxu_dtype):
    """3x3 'same' conv of the (TH+2, W+2, C) zero-bordered scratch as nine
    accumulating MXU dots on shifted views (no im2col patch materialised)."""
    cout = w_ref.shape[-1]
    acc = jnp.zeros((TH * W, cout), jnp.float32)
    for kh in range(3):
        for kw in range(3):
            lhs = pad_ref[kh:kh + TH, kw:kw + W, :].reshape(TH * W, C)
            acc += jnp.dot(lhs.astype(mxu_dtype), w_ref[kh * 3 + kw],
                           preferred_element_type=jnp.float32)
    return acc + b_ref[...]


def _partial_stats(acc):
    """Per-channel [sum, sum_sq] for this strip (reduced across grid in XLA)."""
    return jnp.concatenate([jnp.sum(acc, axis=0, keepdims=True),
                            jnp.sum(acc * acc, axis=0, keepdims=True)], axis=0)


def _convA_kernel(x_ref, top_ref, bot_ref, w_ref, b_ref, y_ref, st_ref,
                  pad_ref, *, TH, W2, Cin, pool, mxu_dtype):
    """[optional MaxPool2d(2)] + conv1(3x3) + bias on one (batch, row-strip).

    Emits the pre-BN activation strip and per-strip BN1 partial statistics.
    """
    zcol = jnp.zeros((TH + 2, 1, Cin), jnp.float32)
    pad_ref[:, 0:1, :] = zcol                       # zero-pad side columns
    pad_ref[:, W2 + 1:W2 + 2, :] = zcol

    if pool:
        # Block is (1, TH, 2, W2, 2*Cin): axis 2 = row pair of the 2x2 window;
        # the last axis packs the column pair as [j*Cin + c].
        top = x_ref[0, :, 0, :, :]
        bot = x_ref[0, :, 1, :, :]
        m = jnp.maximum(top, bot)
        interior = jnp.maximum(m[..., :Cin], m[..., Cin:])       # (TH, W2, Cin)
    else:
        interior = x_ref[0]

    pad_ref[1:TH + 1, 1:W2 + 1, :] = interior.astype(jnp.float32)
    # 1-row conv halos (zeros at the image border, supplied by the wrapper).
    pad_ref[0:1, 1:W2 + 1, :] = top_ref[0].astype(jnp.float32)
    pad_ref[TH + 1:TH + 2, 1:W2 + 1, :] = bot_ref[0].astype(jnp.float32)

    acc = _conv3x3(pad_ref, w_ref, b_ref, TH, W2, Cin, mxu_dtype)
    y_ref[0] = acc.reshape(TH, W2, -1).astype(y_ref.dtype)
    st_ref[...] = _partial_stats(acc).reshape(1, 1, 2, -1)


def _convB_kernel(y1_ref, top_ref, bot_ref, sc_ref, sh_ref, w_ref, b_ref,
                  y2_ref, st_ref, pad_ref, *, TH, W2, Cmid, ns, mxu_dtype):
    """BN1 + ReLU (global batch stats folded to scale/shift) fused with
    conv2(3x3) + bias; emits pre-BN2 activation + BN2 partial statistics."""
    r = pl.program_id(1)
    zcol = jnp.zeros((TH + 2, 1, Cmid), jnp.float32)
    pad_ref[:, 0:1, :] = zcol
    pad_ref[:, W2 + 1:W2 + 2, :] = zcol

    def act(v):                                     # BN1 + ReLU
        return jnp.maximum(v.astype(jnp.float32) * sc_ref[...] + sh_ref[...], 0.0)

    pad_ref[1:TH + 1, 1:W2 + 1, :] = act(y1_ref[0])
    # Halo rows: real neighbor activations inside the image, zero activations
    # at the top/bottom border (conv padding is zero *post*-BN/ReLU -> mask).
    vt = (r > 0).astype(jnp.float32)
    vb = (r < ns - 1).astype(jnp.float32)
    pad_ref[0:1, 1:W2 + 1, :] = act(top_ref[0]) * vt
    pad_ref[TH + 1:TH + 2, 1:W2 + 1, :] = act(bot_ref[0]) * vb

    acc = _conv3x3(pad_ref, w_ref, b_ref, TH, W2, Cmid, mxu_dtype)
    y2_ref[0] = acc.reshape(TH, W2, -1).astype(y2_ref.dtype)
    st_ref[...] = _partial_stats(acc).reshape(1, 1, 2, -1)


# TODO(synk): in a full UNet this standalone elementwise pass is fused into the
# next block's stage-A input path (same pattern as BN1 inside stage B).
def _bn_relu_kernel(y_ref, sc_ref, sh_ref, o_ref):
    """Final BN2 + ReLU apply."""
    o_ref[0] = jnp.maximum(
        y_ref[0].astype(jnp.float32) * sc_ref[...] + sh_ref[...], 0.0)


# --------------------------------- wrapper ----------------------------------

def _bn_affine(partial_stats, gamma, beta, count):
    """Fold training-mode batch statistics into per-channel scale / shift."""
    # TODO(synk): E[x^2]-E[x]^2 in f32 is cancellation-prone for very large
    # activations; switch to shifted/Welford accumulation if that ever bites.
    s = jnp.sum(partial_stats, axis=(0, 1))                      # (2, C)
    mean = s[0] / count
    var = jnp.maximum(s[1] / count - mean * mean, 0.0)
    scale = gamma.reshape(1, -1) * jax.lax.rsqrt(var + EPS).reshape(1, -1)
    shift = beta.reshape(1, -1) - mean.reshape(1, -1) * scale
    return scale.astype(jnp.float32), shift.astype(jnp.float32)


def _conv_block(x, params, *, pool, row_block=None, compute_dtype=jnp.bfloat16):
    """[optional MaxPool2d(2)] + DuoCon on an NHWC activation (f32 in/out).

    compute_dtype is the dtype of the MXU operands and of the two inter-stage
    (pre-BN) activations in HBM; accumulation and BN statistics are f32.
    """
    w1, b1, g1, be1, w2, b2, g2, be2 = params
    N, Hin, Win, Cin = x.shape
    if pool:
        assert Hin % 2 == 0 and Win % 2 == 0, "MaxPool2d(2) expects even H, W"
        H2, W2 = Hin // 2, Win // 2
    else:
        H2, W2 = Hin, Win
    Cmid, Cout = w1.shape[-1], w2.shape[-1]

    budget = _vmem_budget_bytes()
    TH = row_block if row_block is not None else _pick_row_block(
        H2, W2, Cin, Cmid, Cout, budget)
    assert H2 % TH == 0, (H2, TH)
    ns = H2 // TH
    count = float(N * H2 * W2)

    cp = pltpu.CompilerParams(dimension_semantics=("parallel", "parallel"),
                              vmem_limit_bytes=int(budget))

    # Weight layout for the nine shifted dots: (kh*3+kw, Cin, Cout).
    w1k = w1.reshape(9, Cin, Cmid).astype(compute_dtype)
    w2k = w2.reshape(9, Cmid, Cout).astype(compute_dtype)
    b1k = b1.reshape(1, Cmid).astype(jnp.float32)
    b2k = b2.reshape(1, Cout).astype(jnp.float32)

    # ---- stage A inputs: strip view + 1-row conv halos (tiny XLA gathers) ---
    zrow = jnp.zeros((N, 1, W2, Cin), x.dtype)
    if pool:
        x6 = x.reshape(N, H2, 2, W2, 2, Cin)
        xA = x6.reshape(N, H2, 2, W2, 2 * Cin)          # pool-friendly view

        def pooled_rows(rows):
            return jnp.max(x6[:, jnp.asarray(rows)], axis=(2, 4))

        if ns > 1:
            top = jnp.concatenate(
                [zrow, pooled_rows([r * TH - 1 for r in range(1, ns)])], axis=1)
            bot = jnp.concatenate(
                [pooled_rows([(r + 1) * TH for r in range(ns - 1)]), zrow],
                axis=1)
        else:
            top, bot = zrow, zrow
        xA_spec = pl.BlockSpec((1, TH, 2, W2, 2 * Cin),
                               lambda n, r: (n, r, 0, 0, 0))
    else:
        xA = x
        if ns > 1:
            top = jnp.concatenate([zrow, x[:, TH - 1::TH][:, :ns - 1]], axis=1)
            bot = jnp.concatenate([x[:, TH::TH], zrow], axis=1)
        else:
            top, bot = zrow, zrow
        xA_spec = pl.BlockSpec((1, TH, W2, Cin), lambda n, r: (n, r, 0, 0))

    halo_a = pl.BlockSpec((1, 1, W2, Cin), lambda n, r: (n, r, 0, 0))
    strip_mid = pl.BlockSpec((1, TH, W2, Cmid), lambda n, r: (n, r, 0, 0))
    strip_out = pl.BlockSpec((1, TH, W2, Cout), lambda n, r: (n, r, 0, 0))

    # ---- stage A: [pool +] conv1 + bias, per-strip BN1 partial stats --------
    y1, s1p = pl.pallas_call(
        functools.partial(_convA_kernel, TH=TH, W2=W2, Cin=Cin, pool=pool,
                          mxu_dtype=compute_dtype),
        out_shape=(jax.ShapeDtypeStruct((N, H2, W2, Cmid), compute_dtype),
                   jax.ShapeDtypeStruct((N, ns, 2, Cmid), jnp.float32)),
        grid_spec=pltpu.PrefetchScalarGridSpec(
            num_scalar_prefetch=0, grid=(N, ns),
            in_specs=[xA_spec, halo_a, halo_a,
                      pl.BlockSpec((9, Cin, Cmid), lambda n, r: (0, 0, 0)),
                      pl.BlockSpec((1, Cmid), lambda n, r: (0, 0))],
            out_specs=[strip_mid,
                       pl.BlockSpec((1, 1, 2, Cmid), lambda n, r: (n, r, 0, 0))],
            scratch_shapes=[pltpu.VMEM((TH + 2, W2 + 2, Cin), jnp.float32)]),
        compiler_params=cp,
    )(xA, top, bot, w1k, b1k)

    # BN1 batch stats -> per-channel scale / shift (tiny XLA reduction).
    sc1, sh1 = _bn_affine(s1p, g1, be1, count)

    # ---- stage B inputs: y1 strip + 1-row halos ------------------------------
    zrow_m = jnp.zeros((N, 1, W2, Cmid), y1.dtype)
    if ns > 1:
        y1t = jnp.concatenate([zrow_m, y1[:, TH - 1::TH][:, :ns - 1]], axis=1)
        y1b = jnp.concatenate([y1[:, TH::TH], zrow_m], axis=1)
    else:
        y1t, y1b = zrow_m, zrow_m
    halo_b = pl.BlockSpec((1, 1, W2, Cmid), lambda n, r: (n, r, 0, 0))

    # ---- stage B: BN1+ReLU + conv2 + bias, per-strip BN2 partial stats ------
    y2, s2p = pl.pallas_call(
        functools.partial(_convB_kernel, TH=TH, W2=W2, Cmid=Cmid, ns=ns,
                          mxu_dtype=compute_dtype),
        out_shape=(jax.ShapeDtypeStruct((N, H2, W2, Cout), compute_dtype),
                   jax.ShapeDtypeStruct((N, ns, 2, Cout), jnp.float32)),
        grid_spec=pltpu.PrefetchScalarGridSpec(
            num_scalar_prefetch=0, grid=(N, ns),
            in_specs=[strip_mid, halo_b, halo_b,
                      pl.BlockSpec((1, Cmid), lambda n, r: (0, 0)),
                      pl.BlockSpec((1, Cmid), lambda n, r: (0, 0)),
                      pl.BlockSpec((9, Cmid, Cout), lambda n, r: (0, 0, 0)),
                      pl.BlockSpec((1, Cout), lambda n, r: (0, 0))],
            out_specs=[strip_out,
                       pl.BlockSpec((1, 1, 2, Cout), lambda n, r: (n, r, 0, 0))],
            scratch_shapes=[pltpu.VMEM((TH + 2, W2 + 2, Cmid), jnp.float32)]),
        compiler_params=cp,
    )(y1, y1t, y1b, sc1, sh1, w2k, b2k)

    sc2, sh2 = _bn_affine(s2p, g2, be2, count)

    # ---- stage C: BN2 + ReLU apply ------------------------------------------
    out = pl.pallas_call(
        _bn_relu_kernel,
        out_shape=jax.ShapeDtypeStruct((N, H2, W2, Cout), jnp.float32),
        grid_spec=pltpu.PrefetchScalarGridSpec(
            num_scalar_prefetch=0, grid=(N, ns),
            in_specs=[strip_out,
                      pl.BlockSpec((1, Cout), lambda n, r: (0, 0)),
                      pl.BlockSpec((1, Cout), lambda n, r: (0, 0))],
            out_specs=pl.BlockSpec((1, TH, W2, Cout), lambda n, r: (n, r, 0, 0))),
        compiler_params=cp,
    )(y2, sc2, sh2)
    return out


def down_forward(x_nchw, params, *, row_block=None, compute_dtype=jnp.bfloat16):
    """PyTorch Down (MaxPool2d(2) + DuoCon), NCHW in / NCHW out."""
    x = jnp.transpose(x_nchw, (0, 2, 3, 1))              # NCHW -> NHWC
    out = _conv_block(x, params, pool=True, row_block=row_block,
                      compute_dtype=compute_dtype)
    return jnp.transpose(out, (0, 3, 1, 2))              # NHWC -> NCHW


def duocon_forward(x_nchw, params, *, row_block=None,
                   compute_dtype=jnp.bfloat16):
    """PyTorch DuoCon (no pooling), NCHW in / NCHW out — Unet.first."""
    x = jnp.transpose(x_nchw, (0, 2, 3, 1))
    out = _conv_block(x, params, pool=False, row_block=row_block,
                      compute_dtype=compute_dtype)
    return jnp.transpose(out, (0, 3, 1, 2))


def unet_forward(x_nchw, all_params, *, compute_dtype=jnp.bfloat16):
    """Full Unet.forward: first DuoCon then four Down blocks, kept NHWC
    end-to-end internally (layout glue only at the NCHW API boundary)."""
    # TODO(synk): not exercised in __main__ (15 kernel compiles at 64..1024
    # channels); every block is the same code path validated below.
    h = jnp.transpose(x_nchw, (0, 2, 3, 1))
    h = _conv_block(h, all_params[0], pool=False, compute_dtype=compute_dtype)
    for p in all_params[1:]:
        h = _conv_block(h, p, pool=True, compute_dtype=compute_dtype)
    return jnp.transpose(h, (0, 3, 1, 2))


def init_params(key, cin, cout, cmid=None):
    """Deterministic synthetic parameters (shapes from DuoCon.__init__)."""
    if cmid is None:
        cmid = cout
    ks = jax.random.split(key, 8)
    w1 = jax.random.normal(ks[0], (3, 3, cin, cmid), jnp.float32) * 0.2   # HWIO
    b1 = jax.random.normal(ks[1], (1, cmid), jnp.float32) * 0.1
    g1 = 1.0 + jax.random.normal(ks[2], (1, cmid), jnp.float32) * 0.1
    be1 = jax.random.normal(ks[3], (1, cmid), jnp.float32) * 0.1
    w2 = jax.random.normal(ks[4], (3, 3, cmid, cout), jnp.float32) * 0.2
    b2 = jax.random.normal(ks[5], (1, cout), jnp.float32) * 0.1
    g2 = 1.0 + jax.random.normal(ks[6], (1, cout), jnp.float32) * 0.1
    be2 = jax.random.normal(ks[7], (1, cout), jnp.float32) * 0.1
    return (w1, b1, g1, be1, w2, b2, g2, be2)


# --------------------------- pure-JAX reference -----------------------------

def _ref_conv_bn_relu(x, w, b, g, beta):
    y = jax.lax.conv_general_dilated(
        x, w, (1, 1), ((1, 1), (1, 1)),
        dimension_numbers=("NHWC", "HWIO", "NHWC"),
        precision=jax.lax.Precision.HIGHEST)
    y = y + b.reshape(1, 1, 1, -1)
    mean = jnp.mean(y, axis=(0, 1, 2), keepdims=True)
    var = jnp.mean((y - mean) ** 2, axis=(0, 1, 2), keepdims=True)
    y = (y - mean) / jnp.sqrt(var + EPS) * g.reshape(1, 1, 1, -1) \
        + beta.reshape(1, 1, 1, -1)
    return jnp.maximum(y, 0.0)


def _ref_block(x_nchw, params, *, pool):
    w1, b1, g1, be1, w2, b2, g2, be2 = params
    x = jnp.transpose(x_nchw, (0, 2, 3, 1))
    if pool:
        N, H, W, C = x.shape
        x = jnp.max(x.reshape(N, H // 2, 2, W // 2, 2, C), axis=(2, 4))
    h = _ref_conv_bn_relu(x, w1, b1, g1, be1)
    h = _ref_conv_bn_relu(h, w2, b2, g2, be2)
    return jnp.transpose(h, (0, 3, 1, 2))


def down_ref(x_nchw, params):
    return _ref_block(x_nchw, params, pool=True)


def duocon_ref(x_nchw, params):
    return _ref_block(x_nchw, params, pool=False)


# ---------------------------------- main ------------------------------------

if __name__ == "__main__":
    key = jax.random.PRNGKey(0)
    kx, kp, kx2, kp2 = jax.random.split(key, 4)

    # --- Down block: 2 batch x 2 row-strips grid (halo path exercised) -------
    N, Cin, H, W, Cout = 2, 4, 16, 16, 8
    x = jax.random.normal(kx, (N, Cin, H, W), jnp.float32)
    params = init_params(kp, Cin, Cout)
    ref = down_ref(x, params)

    # f32 compute path: tight check of pooling / halos / conv / BN structure.
    out_f32 = jax.block_until_ready(
        down_forward(x, params, row_block=4, compute_dtype=jnp.float32))
    assert out_f32.shape == (N, Cout, H // 2, W // 2), out_f32.shape
    assert jnp.allclose(out_f32, ref, atol=3e-3, rtol=3e-3), \
        float(jnp.max(jnp.abs(out_f32 - ref)))

    # Default bf16 MXU / bf16 inter-stage path (looser numerics vs f32 ref).
    out_bf16 = jax.block_until_ready(down_forward(x, params, row_block=4))
    assert out_bf16.shape == (N, Cout, H // 2, W // 2), out_bf16.shape
    assert jnp.allclose(out_bf16, ref, atol=1e-1, rtol=1e-1), \
        float(jnp.max(jnp.abs(out_bf16 - ref)))

    # --- first-layer DuoCon (no pooling) path ---------------------------------
    x1 = jax.random.normal(kx2, (N, Cin, 8, 8), jnp.float32)
    p1 = init_params(kp2, Cin, Cout)
    out1 = jax.block_until_ready(
        duocon_forward(x1, p1, row_block=4, compute_dtype=jnp.float32))
    ref1 = duocon_ref(x1, p1)
    assert out1.shape == (N, Cout, 8, 8), out1.shape
    assert jnp.allclose(out1, ref1, atol=3e-3, rtol=3e-3), \
        float(jnp.max(jnp.abs(out1 - ref1)))

    print("KERNEL_OK")
</pallas_src>

<mosaic_0001>
module attributes {stable_mosaic.version = 11 : i64} {
  func.func @_convA_kernel(%arg0: i32, %arg1: i32, %arg2: memref<1x4x2x8x8xf32, #tpu.memory_space<vmem>>, %arg3: memref<1x1x8x4xf32, #tpu.memory_space<vmem>>, %arg4: memref<1x1x8x4xf32, #tpu.memory_space<vmem>>, %arg5: memref<9x4x8xf32, #tpu.memory_space<vmem>>, %arg6: memref<1x8xf32, #tpu.memory_space<vmem>>, %arg7: memref<1x4x8x8xf32, #tpu.memory_space<vmem>>, %arg8: memref<1x1x2x8xf32, #tpu.memory_space<vmem>>, %arg9: memref<6x10x4xf32, #tpu.memory_space<vmem>>) attributes {dimension_semantics = [#tpu.dimension_semantics<parallel>, #tpu.dimension_semantics<parallel>], iteration_bounds = array<i64: 2, 2>, scalar_prefetch = 0 : i64, scratch_operands = 1 : i64, tpu.core_type = #tpu.core_type<tc>, window_params = [{transform_indices = @transform_0, window_bounds = array<i64: 1, 4, 2, 8, 8>}, {transform_indices = @transform_1, window_bounds = array<i64: 1, 1, 8, 4>}, {transform_indices = @transform_2, window_bounds = array<i64: 1, 1, 8, 4>}, {pipeline_mode = #tpu.pipeline_mode<synchronous>, transform_indices = @transform_3, window_bounds = array<i64: 9, 4, 8>}, {pipeline_mode = #tpu.pipeline_mode<synchronous>, transform_indices = @transform_4, window_bounds = array<i64: 1, 8>}, {transform_indices = @transform_5, window_bounds = array<i64: 1, 4, 8, 8>}, {transform_indices = @transform_6, window_bounds = array<i64: 1, 1, 2, 8>}]} {
    %cst = arith.constant 0.000000e+00 : f32
    %0 = vector.broadcast %cst : f32 to vector<6x1x4xf32>
    %c0 = arith.constant 0 : index
    %c0_0 = arith.constant 0 : index
    %c0_1 = arith.constant 0 : index
    %1 = vector.load %arg9[%c0, %c0_0, %c0_1] : memref<6x10x4xf32, #tpu.memory_space<vmem>>, vector<6x1x4xf32>
    tpu.vector_store %arg9[%c0, %c0_0, %c0_1], %0 {strides = array<i32>} : memref<6x10x4xf32, #tpu.memory_space<vmem>>, vector<6x1x4xf32>,
    %c0_2 = arith.constant 0 : index
    %c9 = arith.constant 9 : index
    %c0_3 = arith.constant 0 : index
    %2 = vector.load %arg9[%c0_2, %c9, %c0_3] : memref<6x10x4xf32, #tpu.memory_space<vmem>>, vector<6x1x4xf32>
    tpu.vector_store %arg9[%c0_2, %c9, %c0_3], %0 {strides = array<i32>} : memref<6x10x4xf32, #tpu.memory_space<vmem>>, vector<6x1x4xf32>,
    %c0_4 = arith.constant 0 : index
    %c0_5 = arith.constant 0 : index
    %c0_6 = arith.constant 0 : index
    %c0_7 = arith.constant 0 : index
    %c0_8 = arith.constant 0 : index
    %3 = vector.load %arg2[%c0_4, %c0_5, %c0_6, %c0_7, %c0_8] : memref<1x4x2x8x8xf32, #tpu.memory_space<vmem>>, vector<1x4x1x8x8xf32>
    %4 = vector.shape_cast %3 : vector<1x4x1x8x8xf32> to vector<4x8x8xf32>
    %c0_9 = arith.constant 0 : index
    %c0_10 = arith.constant 0 : index
    %c1 = arith.constant 1 : index
    %c0_11 = arith.constant 0 : index
    %c0_12 = arith.constant 0 : index
    %5 = vector.load %arg2[%c0_9, %c0_10, %c1, %c0_11, %c0_12] : memref<1x4x2x8x8xf32, #tpu.memory_space<vmem>>, vector<1x4x1x8x8xf32>
    %6 = vector.shape_cast %5 : vector<1x4x1x8x8xf32> to vector<4x8x8xf32>
    %7 = arith.maximumf %4, %6 : vector<4x8x8xf32>
    %8 = vector.extract_strided_slice %7 {offsets = [0, 0, 0], sizes = [4, 8, 4], strides = [1, 1, 1]} : vector<4x8x8xf32> to vector<4x8x4xf32>
    %9 = vector.extract_strided_slice %7 {offsets = [0, 0, 4], sizes = [4, 8, 4], strides = [1, 1, 1]} : vector<4x8x8xf32> to vector<4x8x4xf32>
    %10 = arith.maximumf %8, %9 : vector<4x8x4xf32>
    %c1_13 = arith.constant 1 : index
    %c1_14 = arith.constant 1 : index
    %c0_15 = arith.constant 0 : index
    %11 = vector.load %arg9[%c1_13, %c1_14, %c0_15] : memref<6x10x4xf32, #tpu.memory_space<vmem>>, vector<4x8x4xf32>
    tpu.vector_store %arg9[%c1_13, %c1_14, %c0_15], %10 {strides = array<i32>} : memref<6x10x4xf32, #tpu.memory_space<vmem>>, vector<4x8x4xf32>,
    %c0_16 = arith.constant 0 : index
    %c0_17 = arith.constant 0 : index
    %c0_18 = arith.constant 0 : index
    %c0_19 = arith.constant 0 : index
    %12 = vector.load %arg3[%c0_16, %c0_17, %c0_18, %c0_19] : memref<1x1x8x4xf32, #tpu.memory_space<vmem>>, vector<1x1x8x4xf32>
    %13 = vector.shape_cast %12 : vector<1x1x8x4xf32> to vector<1x8x4xf32>
    %c0_20 = arith.constant 0 : index
    %c1_21 = arith.constant 1 : index
    %c0_22 = arith.constant 0 : index
    %14 = vector.load %arg9[%c0_20, %c1_21, %c0_22] : memref<6x10x4xf32, #tpu.memory_space<vmem>>, vector<1x8x4xf32>
    tpu.vector_store %arg9[%c0_20, %c1_21, %c0_22], %13 {strides = array<i32>} : memref<6x10x4xf32, #tpu.memory_space<vmem>>, vector<1x8x4xf32>,
    %c0_23 = arith.constant 0 : index
    %c0_24 = arith.constant 0 : index
    %c0_25 = arith.constant 0 : index
    %c0_26 = arith.constant 0 : index
    %15 = vector.load %arg4[%c0_23, %c0_24, %c0_25, %c0_26] : memref<1x1x8x4xf32, #tpu.memory_space<vmem>>, vector<1x1x8x4xf32>
    %16 = vector.shape_cast %15 : vector<1x1x8x4xf32> to vector<1x8x4xf32>
    %c5 = arith.constant 5 : index
    %c1_27 = arith.constant 1 : index
    %c0_28 = arith.constant 0 : index
    %17 = vector.load %arg9[%c5, %c1_27, %c0_28] : memref<6x10x4xf32, #tpu.memory_space<vmem>>, vector<1x8x4xf32>
    tpu.vector_store %arg9[%c5, %c1_27, %c0_28], %16 {strides = array<i32>} : memref<6x10x4xf32, #tpu.memory_space<vmem>>, vector<1x8x4xf32>,
    %cst_29 = arith.constant 0.000000e+00 : f32
    %18 = vector.broadcast %cst_29 : f32 to vector<32x8xf32>
    %c0_30 = arith.constant 0 : index
    %c0_31 = arith.constant 0 : index
    %c0_32 = arith.constant 0 : index
    %19 = vector.load %arg9[%c0_30, %c0_31, %c0_32] : memref<6x10x4xf32, #tpu.memory_space<vmem>>, vector<4x8x4xf32>
    %20 = vector.shape_cast %19 : vector<4x8x4xf32> to vector<32x4xf32>
    %c0_33 = arith.constant 0 : index
    %c0_34 = arith.constant 0 : index
    %c0_35 = arith.constant 0 : index
    %21 = vector.load %arg5[%c0_33, %c0_34, %c0_35] : memref<9x4x8xf32, #tpu.memory_space<vmem>>, vector<1x4x8xf32>
    %22 = vector.shape_cast %21 : vector<1x4x8xf32> to vector<4x8xf32>
    %cst_36 = arith.constant dense<0.000000e+00> : vector<32x8xf32>
    %23 = tpu.matmul %20, %22, %cst_36 {dimension_numbers = #tpu.dot_dimension_numbers<[1], [0], [0], [1], [0, 0, 1, 1], [], []>} : vector<32x4xf32>, vector<4x8xf32>, vector<32x8xf32> -> vector<32x8xf32>
    %24 = arith.addf %18, %23 : vector<32x8xf32>
    %c0_37 = arith.constant 0 : index
    %c1_38 = arith.constant 1 : index
    %c0_39 = arith.constant 0 : index
    %25 = vector.load %arg9[%c0_37, %c1_38, %c0_39] : memref<6x10x4xf32, #tpu.memory_space<vmem>>, vector<4x8x4xf32>
    %26 = vector.shape_cast %25 : vector<4x8x4xf32> to vector<32x4xf32>
    %c1_40 = arith.constant 1 : index
    %c0_41 = arith.constant 0 : index
    %c0_42 = arith.constant 0 : index
    %27 = vector.load %arg5[%c1_40, %c0_41, %c0_42] : memref<9x4x8xf32, #tpu.memory_space<vmem>>, vector<1x4x8xf32>
    %28 = vector.shape_cast %27 : vector<1x4x8xf32> to vector<4x8xf32>
    %cst_43 = arith.constant dense<0.000000e+00> : vector<32x8xf32>
    %29 = tpu.matmul %26, %28, %cst_43 {dimension_numbers = #tpu.dot_dimension_numbers<[1], [0], [0], [1], [0, 0, 1, 1], [], []>} : vector<32x4xf32>, vector<4x8xf32>, vector<32x8xf32> -> vector<32x8xf32>
    %30 = arith.addf %24, %29 : vector<32x8xf32>
    %c0_44 = arith.constant 0 : index
    %c2 = arith.constant 2 : index
    %c0_45 = arith.constant 0 : index
    %31 = vector.load %arg9[%c0_44, %c2, %c0_45] : memref<6x10x4xf32, #tpu.memory_space<vmem>>, vector<4x8x4xf32>
    %32 = vector.shape_cast %31 : vector<4x8x4xf32> to vector<32x4xf32>
    %c2_46 = arith.constant 2 : index
    %c0_47 = arith.constant 0 : index
    %c0_48 = arith.constant 0 : index
    %33 = vector.load %arg5[%c2_46, %c0_47, %c0_48] : memref<9x4x8xf32, #tpu.memory_space<vmem>>, vector<1x4x8xf32>
    %34 = vector.shape_cast %33 : vector<1x4x8xf32> to vector<4x8xf32>
    %cst_49 = arith.constant dense<0.000000e+00> : vector<32x8xf32>
    %35 = tpu.matmul %32, %34, %cst_49 {dimension_numbers = #tpu.dot_dimension_numbers<[1], [0], [0], [1], [0, 0, 1, 1], [], []>} : vector<32x4xf32>, vector<4x8xf32>, vector<32x8xf32> -> vector<32x8xf32>
    %36 = arith.addf %30, %35 : vector<32x8xf32>
    %c1_50 = arith.constant 1 : index
    %c0_51 = arith.constant 0 : index
    %c0_52 = arith.constant 0 : index
    %37 = vector.load %arg9[%c1_50, %c0_51, %c0_52] : memref<6x10x4xf32, #tpu.memory_space<vmem>>, vector<4x8x4xf32>
    %38 = vector.shape_cast %37 : vector<4x8x4xf32> to vector<32x4xf32>
    %c3 = arith.constant 3 : index
    %c0_53 = arith.constant 0 : index
    %c0_54 = arith.constant 0 : index
    %39 = vector.load %arg5[%c3, %c0_53, %c0_54] : memref<9x4x8xf32, #tpu.memory_space<vmem>>, vector<1x4x8xf32>
    %40 = vector.shape_cast %39 : vector<1x4x8xf32> to vector<4x8xf32>
    %cst_55 = arith.constant dense<0.000000e+00> : vector<32x8xf32>
    %41 = tpu.matmul %38, %40, %cst_55 {dimension_numbers = #tpu.dot_dimension_numbers<[1], [0], [0], [1], [0, 0, 1, 1], [], []>} : vector<32x4xf32>, vector<4x8xf32>, vector<32x8xf32> -> vector<32x8xf32>
    %42 = arith.addf %36, %41 : vector<32x8xf32>
    %c1_56 = arith.constant 1 : index
    %c1_57 = arith.constant 1 : index
    %c0_58 = arith.constant 0 : index
    %43 = vector.load %arg9[%c1_56, %c1_57, %c0_58] : memref<6x10x4xf32, #tpu.memory_space<vmem>>, vector<4x8x4xf32>
    %44 = vector.shape_cast %43 : vector<4x8x4xf32> to vector<32x4xf32>
    %c4 = arith.constant 4 : index
    %c0_59 = arith.constant 0 : index
    %c0_60 = arith.constant 0 : index
    %45 = vector.load %arg5[%c4, %c0_59, %c0_60] : memref<9x4x8xf32, #tpu.memory_space<vmem>>, vector<1x4x8xf32>
    %46 = vector.shape_cast %45 : vector<1x4x8xf32> to vector<4x8xf32>
    %cst_61 = arith.constant dense<0.000000e+00> : vector<32x8xf32>
    %47 = tpu.matmul %44, %46, %cst_61 {dimension_numbers = #tpu.dot_dimension_numbers<[1], [0], [0], [1], [0, 0, 1, 1], [], []>} : vector<32x4xf32>, vector<4x8xf32>, vector<32x8xf32> -> vector<32x8xf32>
    %48 = arith.addf %42, %47 : vector<32x8xf32>
    %c1_62 = arith.constant 1 : index
    %c2_63 = arith.constant 2 : index
    %c0_64 = arith.constant 0 : index
    %49 = vector.load %arg9[%c1_62, %c2_63, %c0_64] : memref<6x10x4xf32, #tpu.memory_space<vmem>>, vector<4x8x4xf32>
    %50 = vector.shape_cast %49 : vector<4x8x4xf32> to vector<32x4xf32>
    %c5_65 = arith.constant 5 : index
    %c0_66 = arith.constant 0 : index
    %c0_67 = arith.constant 0 : index
    %51 = vector.load %arg5[%c5_65, %c0_66, %c0_67] : memref<9x4x8xf32, #tpu.memory_space<vmem>>, vector<1x4x8xf32>
    %52 = vector.shape_cast %51 : vector<1x4x8xf32> to vector<4x8xf32>
    %cst_68 = arith.constant dense<0.000000e+00> : vector<32x8xf32>
    %53 = tpu.matmul %50, %52, %cst_68 {dimension_numbers = #tpu.dot_dimension_numbers<[1], [0], [0], [1], [0, 0, 1, 1], [], []>} : vector<32x4xf32>, vector<4x8xf32>, vector<32x8xf32> -> vector<32x8xf32>
    %54 = arith.addf %48, %53 : vector<32x8xf32>
    %c2_69 = arith.constant 2 : index
    %c0_70 = arith.constant 0 : index
    %c0_71 = arith.constant 0 : index
    %55 = vector.load %arg9[%c2_69, %c0_70, %c0_71] : memref<6x10x4xf32, #tpu.memory_space<vmem>>, vector<4x8x4xf32>
    %56 = vector.shape_cast %55 : vector<4x8x4xf32> to vector<32x4xf32>
    %c6 = arith.constant 6 : index
    %c0_72 = arith.constant 0 : index
    %c0_73 = arith.constant 0 : index
    %57 = vector.load %arg5[%c6, %c0_72, %c0_73] : memref<9x4x8xf32, #tpu.memory_space<vmem>>, vector<1x4x8xf32>
    %58 = vector.shape_cast %57 : vector<1x4x8xf32> to vector<4x8xf32>
    %cst_74 = arith.constant dense<0.000000e+00> : vector<32x8xf32>
    %59 = tpu.matmul %56, %58, %cst_74 {dimension_numbers = #tpu.dot_dimension_numbers<[1], [0], [0], [1], [0, 0, 1, 1], [], []>} : vector<32x4xf32>, vector<4x8xf32>, vector<32x8xf32> -> vector<32x8xf32>
    %60 = arith.addf %54, %59 : vector<32x8xf32>
    %c2_75 = arith.constant 2 : index
    %c1_76 = arith.constant 1 : index
    %c0_77 = arith.constant 0 : index
    %61 = vector.load %arg9[%c2_75, %c1_76, %c0_77] : memref<6x10x4xf32, #tpu.memory_space<vmem>>, vector<4x8x4xf32>
    %62 = vector.shape_cast %61 : vector<4x8x4xf32> to vector<32x4xf32>
    %c7 = arith.constant 7 : index
    %c0_78 = arith.constant 0 : index
    %c0_79 = arith.constant 0 : index
    %63 = vector.load %arg5[%c7, %c0_78, %c0_79] : memref<9x4x8xf32, #tpu.memory_space<vmem>>, vector<1x4x8xf32>
    %64 = vector.shape_cast %63 : vector<1x4x8xf32> to vector<4x8xf32>
    %cst_80 = arith.constant dense<0.000000e+00> : vector<32x8xf32>
    %65 = tpu.matmul %62, %64, %cst_80 {dimension_numbers = #tpu.dot_dimension_numbers<[1], [0], [0], [1], [0, 0, 1, 1], [], []>} : vector<32x4xf32>, vector<4x8xf32>, vector<32x8xf32> -> vector<32x8xf32>
    %66 = arith.addf %60, %65 : vector<32x8xf32>
    %c2_81 = arith.constant 2 : index
    %c2_82 = arith.constant 2 : index
    %c0_83 = arith.constant 0 : index
    %67 = vector.load %arg9[%c2_81, %c2_82, %c0_83] : memref<6x10x4xf32, #tpu.memory_space<vmem>>, vector<4x8x4xf32>
    %68 = vector.shape_cast %67 : vector<4x8x4xf32> to vector<32x4xf32>
    %c8 = arith.constant 8 : index
    %c0_84 = arith.constant 0 : index
    %c0_85 = arith.constant 0 : index
    %69 = vector.load %arg5[%c8, %c0_84, %c0_85] : memref<9x4x8xf32, #tpu.memory_space<vmem>>, vector<1x4x8xf32>
    %70 = vector.shape_cast %69 : vector<1x4x8xf32> to vector<4x8xf32>
    %cst_86 = arith.constant dense<0.000000e+00> : vector<32x8xf32>
    %71 = tpu.matmul %68, %70, %cst_86 {dimension_numbers = #tpu.dot_dimension_numbers<[1], [0], [0], [1], [0, 0, 1, 1], [], []>} : vector<32x4xf32>, vector<4x8xf32>, vector<32x8xf32> -> vector<32x8xf32>
    %72 = arith.addf %66, %71 : vector<32x8xf32>
    %c0_87 = arith.constant 0 : index
    %c0_88 = arith.constant 0 : index
    %73 = vector.load %arg6[%c0_87, %c0_88] : memref<1x8xf32, #tpu.memory_space<vmem>>, vector<1x8xf32>
    %74 = vector.broadcast %73 : vector<1x8xf32> to vector<32x8xf32>
    %75 = arith.addf %72, %74 : vector<32x8xf32>
    %76 = vector.shape_cast %75 : vector<32x8xf32> to vector<4x8x8xf32>
    %c0_89 = arith.constant 0 : index
    %c0_90 = arith.constant 0 : index
    %c0_91 = arith.constant 0 : index
    %c0_92 = arith.constant 0 : index
    %77 = vector.load %arg7[%c0_89, %c0_90, %c0_91, %c0_92] : memref<1x4x8x8xf32, #tpu.memory_space<vmem>>, vector<1x4x8x8xf32>
    %78 = vector.shape_cast %77 : vector<1x4x8x8xf32> to vector<4x8x8xf32>
    %79 = vector.shape_cast %76 : vector<4x8x8xf32> to vector<1x4x8x8xf32>
    tpu.vector_store %arg7[%c0_89, %c0_90, %c0_91, %c0_92], %79 {strides = array<i32>} : memref<1x4x8x8xf32, #tpu.memory_space<vmem>>, vector<1x4x8x8xf32>,
    %cst_93 = arith.constant dense<0.000000e+00> : vector<8xf32>
    %80 = vector.multi_reduction <add>, %75, %cst_93 [0] : vector<32x8xf32> to vector<8xf32>
    %81 = vector.shape_cast %80 : vector<8xf32> to vector<1x8xf32>
    %82 = arith.mulf %75, %75 : vector<32x8xf32>
    %cst_94 = arith.constant dense<0.000000e+00> : vector<8xf32>
    %83 = vector.multi_reduction <add>, %82, %cst_94 [0] : vector<32x8xf32> to vector<8xf32>
    %84 = vector.shape_cast %83 : vector<8xf32> to vector<1x8xf32>
    %85 = tpu.concatenate %81, %84 in 0 : vector<1x8xf32>, vector<1x8xf32> -> vector<2x8xf32>
    %86 = vector.shape_cast %85 : vector<2x8xf32> to vector<1x1x2x8xf32>
    %c0_95 = arith.constant 0 : index
    %c0_96 = arith.constant 0 : index
    %c0_97 = arith.constant 0 : index
    %c0_98 = arith.constant 0 : index
    %87 = vector.load %arg8[%c0_95, %c0_96, %c0_97, %c0_98] : memref<1x1x2x8xf32, #tpu.memory_space<vmem>>, vector<1x1x2x8xf32>
    tpu.vector_store %arg8[%c0_95, %c0_96, %c0_97, %c0_98], %86 {strides = array<i32>} : memref<1x1x2x8xf32, #tpu.memory_space<vmem>>, vector<1x1x2x8xf32>,
    return
  }
  func.func @transform_0(%arg0: i32, %arg1: i32) -> (i32, i32, i32, i32, i32) {
    %c0_i32 = arith.constant 0 : i32
    %c0_i32_0 = arith.constant 0 : i32
    %c0_i32_1 = arith.constant 0 : i32
    %c0_i32_2 = arith.constant 0 : i32
    return %arg0, %arg1, %c0_i32, %c0_i32_0, %c0_i32_1 : i32, i32, i32, i32, i32
  }
  func.func @transform_1(%arg0: i32, %arg1: i32) -> (i32, i32, i32, i32) {
    %c0_i32 = arith.constant 0 : i32
    %c0_i32_0 = arith.constant 0 : i32
    %c0_i32_1 = arith.constant 0 : i32
    return %arg0, %arg1, %c0_i32, %c0_i32_0 : i32, i32, i32, i32
  }
  func.func @transform_2(%arg0: i32, %arg1: i32) -> (i32, i32, i32, i32) {
    %c0_i32 = arith.constant 0 : i32
    %c0_i32_0 = arith.constant 0 : i32
    %c0_i32_1 = arith.constant 0 : i32
    return %arg0, %arg1, %c0_i32, %c0_i32_0 : i32, i32, i32, i32
  }
  func.func @transform_3(%arg0: i32, %arg1: i32) -> (i32, i32, i32) {
    %c0_i32 = arith.constant 0 : i32
    %c0_i32_0 = arith.constant 0 : i32
    %c0_i32_1 = arith.constant 0 : i32
    %c0_i32_2 = arith.constant 0 : i32
    return %c0_i32, %c0_i32_0, %c0_i32_1 : i32, i32, i32
  }
  func.func @transform_4(%arg0: i32, %arg1: i32) -> (i32, i32) {
    %c0_i32 = arith.constant 0 : i32
    %c0_i32_0 = arith.constant 0 : i32
    %c0_i32_1 = arith.constant 0 : i32
    return %c0_i32, %c0_i32_0 : i32, i32
  }
  func.func @transform_5(%arg0: i32, %arg1: i32) -> (i32, i32, i32, i32) {
    %c0_i32 = arith.constant 0 : i32
    %c0_i32_0 = arith.constant 0 : i32
    %c0_i32_1 = arith.constant 0 : i32
    return %arg0, %arg1, %c0_i32, %c0_i32_0 : i32, i32, i32, i32
  }
  func.func @transform_6(%arg0: i32, %arg1: i32) -> (i32, i32, i32, i32) {
    %c0_i32 = arith.constant 0 : i32
    %c0_i32_0 = arith.constant 0 : i32
    %c0_i32_1 = arith.constant 0 : i32
    return %arg0, %arg1, %c0_i32, %c0_i32_0 : i32, i32, i32, i32
  }
}

</mosaic_0001>

<llo_original>
// kernel: tpu_custom_call.1
$region0: #{tpu_custom_call.1}
  #allocation0 [shape = 'u32[]', space=smem, size = 0x4, offset = 0x4, fixed_abs, tag = 'smem constant byte address 0x4 - core index']
  #allocation1 [shape = 'u32[144,128]{1,0:T(1,128)}', space=vmem, size = 0x12000, scoped, tag = 'internal scratch']
  #allocation2 [shape = 'f32[6,10,4]{2,1,0:T(8,128)}', space=vmem, size = 0xc000, scoped, tag = 'scratch operand']
  %s0 = inlined_call_operand.hbm [shape: f32[2,8,2,8,8], index: 0, kind: input, shape index: {}]
  %s1 = inlined_call_operand.vmem [shape: f32[2,2,8,4], index: 1, kind: input, shape index: {}]
  %s2 = inlined_call_operand.vmem [shape: f32[2,2,8,4], index: 2, kind: input, shape index: {}]
  %s3 = inlined_call_operand.vmem [shape: f32[9,4,8], index: 3, kind: input, shape index: {}]
  %s4 = inlined_call_operand.vmem [shape: f32[1,8], index: 4, kind: input, shape index: {}]
  %s5 = inlined_call_operand.hbm [shape: f32[2,8,8,8], index: 5, kind: output, shape index: {0}]
  %s6 = inlined_call_operand.hbm [shape: f32[2,2,2,8], index: 6, kind: output, shape index: {1}]
  %7 = xla_tuple %s5, %s6
  %s8 = sld [smem:[#allocation0]]
  $region65: #{tpu_custom_call.1} parent=0
    _
  %s10 = ssub.s32 1, %s8
  %s11 = scalar_select 0, %s10, %s8
  $region1: #{tpu_custom_call.1} parent=0
    #allocation3 [shape = 'u8[65536]{0}', space=vmem, size = 0x10000, scoped, tag = 'input window, operand 0']
    #allocation4 [shape = 's32[2]{0}', space=sflag, size = 0x8, scoped, tag = 'scoped memory for tpu_custom_call.1']
    #allocation5 [shape = 's32[2]{0}', space=sflag, size = 0x8, scoped, tag = 'scoped memory for tpu_custom_call.1']
    #allocation6 [shape = 'u8[32768]{0}', space=vmem, size = 0x8000, scoped, tag = 'output window, operand 0']
    #allocation7 [shape = 'u8[2048]{0}', space=vmem, size = 0x800, scoped, tag = 'output window, operand 1']
    #allocation8 [shape = 's32[2]{0}', space=sflag, size = 0x8, scoped, tag = 'scoped memory for tpu_custom_call.1']
    %12 = vsyncpa [#allocation4], 0
    %s13 = scalar_lea.sflag [#allocation4], 1
    %14 = vsyncpa %s13, 0
    %15 = vsyncpa [#allocation5], 0
    %s16 = scalar_lea.sflag [#allocation5], 1
    %17 = vsyncpa %s16, 0
    %18 = vsyncpa [#allocation8], 0
    %s19 = scalar_lea.sflag [#allocation8], 1
    %20 = vsyncpa %s19, 0
    loop: start=0, step=1, limit=6
    $region2: #{tpu_custom_call.1} parent=1 // loop_pre_header
      _
    $region3: #{tpu_custom_call.1} parent=1 // loop_header
      %s22 = sphi 0, %s26
      %p23 = scmp.ge.s32.totalorder %s22, 6
      %s29 = sphi 0, %s41
      %s30 = sphi 0, %s37
      %s31 = sphi 0, %s29
      %s32 = sphi 0, %s30
      %s33 = sphi 0, %s31
      %s34 = sphi 0, %s32
      %s46 = sphi 0, %s48
      %s49 = sphi 0, %s46
      %s50 = sphi 0, %s49
      %s66 = sphi 0, %s50
      %s74 = sphi 0, %s76
      %s77 = sphi 0, %s74
      %s78 = sphi 0, %s77
      %s94 = sphi 0, %s78
      %s102 = sphi 0, %s104
      %s105 = sphi 0, %s102
      %s106 = sphi 0, %s105
      %s122 = sphi 0, %s106
      %s126 = sphi 0, %s126
      %s128 = sphi 0, %s126
      %s129 = sphi 0, %s128
      %s143 = sphi 0, %s129
      %s147 = sphi 0, %s147
      %s149 = sphi 0, %s147
      %s150 = sphi 0, %s149
      %s164 = sphi 0, %s150
      %s172 = sphi 0, %s174
      %s175 = sphi 0, %s172
      %s176 = sphi 0, %s175
      %s192 = sphi 0, %s176
      %s200 = sphi 0, %s202
      %s203 = sphi 0, %s200
      %s204 = sphi 0, %s203
      %s220 = sphi 0, %s204
    $region4: #{tpu_custom_call.1} parent=1 // loop_header_branch
      %25 = sbr.rel (%p23) target = $region8
    $region5: #{tpu_custom_call.1} parent=1 // loop_body
      %s27 = ssub.s32 %s22, 1
      %s28 = ssub.s32 %s22, 2
      %s35 = sadd.s32 1, %s30
      %p36 = scmp.ge.s32.totalorder %s35, 2
      %s37 = scalar_select %p36, 0, %s35
      %s38 = sadd.s32 1, %s29
      %s39 = scalar_select %p36, %s38, %s29
      %p40 = scmp.ge.s32.totalorder %s39, 2
      %s41 = scalar_select %p40, 0, %s39
      %s42 = ssub.s32 %s29, %s41
      %s43 = ssub.s32 %s30, %s37
      %s44 = sor.u32 %s42, %s43
      %p45 = scmp.eq.s32.totalorder %s44, 0
      %s47 = sadd.s32 %s46, 1
      %s48 = scalar_select %p45, %s46, %s47
      %p51 = pneg %p45
      %p52 = scmp.eq.s32.totalorder %s22, 3
      %p53 = por %p51, %p52
      %p54 = scmp.ne.s32.totalorder %s46, %s49
      %p55 = scmp.eq.s32.totalorder %s22, 0
      %p56 = por %p54, %p55
      %p57 = scmp.ne.s32.totalorder %s46, %s49
      %p58 = scmp.eq.s32.totalorder %s27, 3
      %p59 = por %p57, %p58
      %p60 = scmp.ne.s32.totalorder %s49, %s50
      %p61 = scmp.eq.s32.totalorder %s27, 0
      %p62 = por %p60, %p61
      %p63 = scmp.ne.s32.totalorder %s49, %s50
      %p64 = scmp.eq.s32.totalorder %s28, 3
      %p65 = por %p63, %p64
      %p67 = scmp.ne.s32.totalorder %s50, %s66
      %p68 = scmp.eq.s32.totalorder %s28, 0
      %p69 = por %p67, %p68
      %s70 = ssub.s32 %s29, %s41
      %s71 = ssub.s32 %s30, %s37
      %s72 = sor.u32 %s70, %s71
      %p73 = scmp.eq.s32.totalorder %s72, 0
      %s75 = sadd.s32 %s74, 1
      %s76 = scalar_select %p73, %s74, %s75
      %p79 = pneg %p73
      %p80 = scmp.eq.s32.totalorder %s22, 3
      %p81 = por %p79, %p80
      %p82 = scmp.ne.s32.totalorder %s74, %s77
      %p83 = scmp.eq.s32.totalorder %s22, 0
      %p84 = por %p82, %p83
      %p85 = scmp.ne.s32.totalorder %s74, %s77
      %p86 = scmp.eq.s32.totalorder %s27, 3
      %p87 = por %p85, %p86
      %p88 = scmp.ne.s32.totalorder %s77, %s78
      %p89 = scmp.eq.s32.totalorder %s27, 0
      %p90 = por %p88, %p89
      %p91 = scmp.ne.s32.totalorder %s77, %s78
      %p92 = scmp.eq.s32.totalorder %s28, 3
      %p93 = por %p91, %p92
      %p95 = scmp.ne.s32.totalorder %s78, %s94
      %p96 = scmp.eq.s32.totalorder %s28, 0
      %p97 = por %p95, %p96
      %s98 = ssub.s32 %s29, %s41
      %s99 = ssub.s32 %s30, %s37
      %s100 = sor.u32 %s98, %s99
      %p101 = scmp.eq.s32.totalorder %s100, 0
      %s103 = sadd.s32 %s102, 1
      %s104 = scalar_select %p101, %s102, %s103
      %p107 = pneg %p101
      %p108 = scmp.eq.s32.totalorder %s22, 3
      %p109 = por %p107, %p108
      %p110 = scmp.ne.s32.totalorder %s102, %s105
      %p111 = scmp.eq.s32.totalorder %s22, 0
      %p112 = por %p110, %p111
      %p113 = scmp.ne.s32.totalorder %s102, %s105
      %p114 = scmp.eq.s32.totalorder %s27, 3
      %p115 = por %p113, %p114
      %p116 = scmp.ne.s32.totalorder %s105, %s106
      %p117 = scmp.eq.s32.totalorder %s27, 0
      %p118 = por %p116, %p117
      %p119 = scmp.ne.s32.totalorder %s105, %s106
      %p120 = scmp.eq.s32.totalorder %s28, 3
      %p121 = por %p119, %p120
      %p123 = scmp.ne.s32.totalorder %s106, %s122
      %p124 = scmp.eq.s32.totalorder %s28, 0
      %p125 = por %p123, %p124
      %s127 = sadd.s32 %s126, 1
      %p130 = scmp.eq.s32.totalorder %s22, 3
      %p131 = scmp.ne.s32.totalorder %s126, %s128
      %p132 = scmp.eq.s32.totalorder %s22, 0
      %p133 = por %p131, %p132
      %p134 = scmp.ne.s32.totalorder %s126, %s128
      %p135 = scmp.eq.s32.totalorder %s27, 3
      %p136 = por %p134, %p135
      %p137 = scmp.ne.s32.totalorder %s128, %s129
      %p138 = scmp.eq.s32.totalorder %s27, 0
      %p139 = por %p137, %p138
      %p140 = scmp.ne.s32.totalorder %s128, %s129
      %p141 = scmp.eq.s32.totalorder %s28, 3
      %p142 = por %p140, %p141
      %p144 = scmp.ne.s32.totalorder %s129, %s143
      %p145 = scmp.eq.s32.totalorder %s28, 0
      %p146 = por %p144, %p145
      %s148 = sadd.s32 %s147, 1
      %p151 = scmp.eq.s32.totalorder %s22, 3
      %p152 = scmp.ne.s32.totalorder %s147, %s149
      %p153 = scmp.eq.s32.totalorder %s22, 0
      %p154 = por %p152, %p153
      %p155 = scmp.ne.s32.totalorder %s147, %s149
      %p156 = scmp.eq.s32.totalorder %s27, 3
      %p157 = por %p155, %p156
      %p158 = scmp.ne.s32.totalorder %s149, %s150
      %p159 = scmp.eq.s32.totalorder %s27, 0
      %p160 = por %p158, %p159
      %p161 = scmp.ne.s32.totalorder %s149, %s150
      %p162 = scmp.eq.s32.totalorder %s28, 3
      %p163 = por %p161, %p162
      %p165 = scmp.ne.s32.totalorder %s150, %s164
      %p166 = scmp.eq.s32.totalorder %s28, 0
      %p167 = por %p165, %p166
      %s168 = ssub.s32 %s29, %s41
      %s169 = ssub.s32 %s30, %s37
      %s170 = sor.u32 %s168, %s169
      %p171 = scmp.eq.s32.totalorder %s170, 0
      %s173 = sadd.s32 %s172, 1
      %s174 = scalar_select %p171, %s172, %s173
      %p177 = pneg %p171
      %p178 = scmp.eq.s32.totalorder %s22, 3
      %p179 = por %p177, %p178
      %p180 = scmp.ne.s32.totalorder %s172, %s175
      %p181 = scmp.eq.s32.totalorder %s22, 0
      %p182 = por %p180, %p181
      %p183 = scmp.ne.s32.totalorder %s172, %s175
      %p184 = scmp.eq.s32.totalorder %s27, 3
      %p185 = por %p183, %p184
      %p186 = scmp.ne.s32.totalorder %s175, %s176
      %p187 = scmp.eq.s32.totalorder %s27, 0
      %p188 = por %p186, %p187
      %p189 = scmp.ne.s32.totalorder %s175, %s176
      %p190 = scmp.eq.s32.totalorder %s28, 3
      %p191 = por %p189, %p190
      %p193 = scmp.ne.s32.totalorder %s176, %s192
      %p194 = scmp.eq.s32.totalorder %s28, 0
      %p195 = por %p193, %p194
      %s196 = ssub.s32 %s29, %s41
      %s197 = ssub.s32 %s30, %s37
      %s198 = sor.u32 %s196, %s197
      %p199 = scmp.eq.s32.totalorder %s198, 0
      %s201 = sadd.s32 %s200, 1
      %s202 = scalar_select %p199, %s200, %s201
      %p205 = pneg %p199
      %p206 = scmp.eq.s32.totalorder %s22, 3
      %p207 = por %p205, %p206
      %p208 = scmp.ne.s32.totalorder %s200, %s203
      %p209 = scmp.eq.s32.totalorder %s22, 0
      %p210 = por %p208, %p209
      %p211 = scmp.ne.s32.totalorder %s200, %s203
      %p212 = scmp.eq.s32.totalorder %s27, 3
      %p213 = por %p211, %p212
      %p214 = scmp.ne.s32.totalorder %s203, %s204
      %p215 = scmp.eq.s32.totalorder %s27, 0
      %p216 = por %p214, %p215
      %p217 = scmp.ne.s32.totalorder %s203, %s204
      %p218 = scmp.eq.s32.totalorder %s28, 3
      %p219 = por %p217, %p218
      %p221 = scmp.ne.s32.totalorder %s204, %s220
      %p222 = scmp.eq.s32.totalorder %s28, 0
      %p223 = por %p221, %p222
      %p224 = scmp.le.s32.totalorder 1, %s22
      %p225 = scmp.lt.s32.totalorder %s22, 5
      %p226 = pnand %p224, %p225
      %p227 = pneg %p226
      // Predicated region
      $region9: #{tpu_custom_call.1} parent=5 // pred_check
        _
      $region10: #{tpu_custom_call.1} parent=5 // pred_check_branch
        %229 = sbr.rel (%p226) target = $region12
      $region11: #{tpu_custom_call.1} parent=5 // pred_region
        %s230 = ssub.s32 %s22, 1
        // Predicated region
        $region13: #{tpu_custom_call.1} parent=11 // pred_check
          %p231 = pneg %p139
        $region14: #{tpu_custom_call.1} parent=11 // pred_check_branch
          %233 = sbr.rel (%p231) target = $region16
        $region15: #{tpu_custom_call.1} parent=11 // pred_region
          _
        $region16: #{tpu_custom_call.1} parent=11 // pred_fallthru
          _
        // Predicated region
        $region17: #{tpu_custom_call.1} parent=11 // pred_check
          %p234 = pneg %p160
        $region18: #{tpu_custom_call.1} parent=11 // pred_check_branch
          %236 = sbr.rel (%p234) target = $region20
        $region19: #{tpu_custom_call.1} parent=11 // pred_region
          _
        $region20: #{tpu_custom_call.1} parent=11 // pred_fallthru
          _
      $region12: #{tpu_custom_call.1} parent=5 // pred_fallthru
        _
      %p237 = scmp.lt.s32.totalorder %s22, 4
      // Predicated region
      $region21: #{tpu_custom_call.1} parent=5 // pred_check
        %p238 = pneg %p237
      $region22: #{tpu_custom_call.1} parent=5 // pred_check_branch
        %240 = sbr.rel (%p238) target = $region24
      $region23: #{tpu_custom_call.1} parent=5 // pred_region
        // Predicated region
        $region25: #{tpu_custom_call.1} parent=23 // pred_check
          %p241 = pneg %p56
        $region26: #{tpu_custom_call.1} parent=23 // pred_check_branch
          %243 = sbr.rel (%p241) target = $region28
        $region27: #{tpu_custom_call.1} parent=23 // pred_region
          %s244 = sand.u32 %s46, 1
          %s245 = scalar_lea.sflag [#allocation4], %s244
          %s246 = sand.u32 %s46, 1
          %s247 = smul.addr %s246, 64
          %s248 = scalar_lea.vmem [#allocation3], %s247
          %s249 = smul.u32 4, %s30
          %s251 = ssub.s32 1024, 1024
          %252 = vsyncadd %s245, %s251
          %s253 = smul.addr %s249, 2
          %s254 = smul.addr %s29, 16
          %s255 = sadd.s32 %s253, %s254
          %s256 = smul.addr %s255, 128
          %s257 = scalar_lea.hbm %s0, %s256
          %s258 = sshll.u32 %s248, 4
          %s259 = int_to_ptr.vmem [resolvable:$true] %s258
          %264 = dma.hbm_to_vmem [thread:$0]  %s257, 1024, %s259, %s245, 128, 128, 8
        $region28: #{tpu_custom_call.1} parent=23 // pred_fallthru
          _
        // Predicated region
        $region29: #{tpu_custom_call.1} parent=23 // pred_check
          %p265 = pneg %p84
        $region30: #{tpu_custom_call.1} parent=23 // pred_check_branch
          %267 = sbr.rel (%p265) target = $region32
        $region31: #{tpu_custom_call.1} parent=23 // pred_region
          %p268 = scmp.lt.s32.totalorder %s29, 1
          %s269 = scalar_select %p268, %s29, 1
          %p270 = scmp.lt.s32.totalorder %s30, 1
          %s271 = scalar_select %p270, %s30, 1
          %s272 = smul.addr %s269, 2
          %s273 = sadd.s32 %s271, %s272
          %s274 = smul.addr %s273, 8
          %s275 = scalar_lea.vmem %s1, %s274
        $region32: #{tpu_custom_call.1} parent=23 // pred_fallthru
          _
        // Predicated region
        $region33: #{tpu_custom_call.1} parent=23 // pred_check
          %p276 = pneg %p112
        $region34: #{tpu_custom_call.1} parent=23 // pred_check_branch
          %278 = sbr.rel (%p276) target = $region36
        $region35: #{tpu_custom_call.1} parent=23 // pred_region
          %p279 = scmp.lt.s32.totalorder %s29, 1
          %s280 = scalar_select %p279, %s29, 1
          %p281 = scmp.lt.s32.totalorder %s30, 1
          %s282 = scalar_select %p281, %s30, 1
          %s283 = smul.addr %s280, 2
          %s284 = sadd.s32 %s282, %s283
          %s285 = smul.addr %s284, 8
          %s286 = scalar_lea.vmem %s2, %s285
        $region36: #{tpu_custom_call.1} parent=23 // pred_fallthru
          _
      $region24: #{tpu_custom_call.1} parent=5 // pred_fallthru
        _
      %p287 = scmp.le.s32.totalorder 1, %s22
      %p288 = scmp.lt.s32.totalorder %s22, 5
      %p289 = pnand %p287, %p288
      %p290 = pneg %p289
      // Predicated region
      $region37: #{tpu_custom_call.1} parent=5 // pred_check
        _
      $region38: #{tpu_custom_call.1} parent=5 // pred_check_branch
        %292 = sbr.rel (%p289) target = $region40
      $region39: #{tpu_custom_call.1} parent=5 // pred_region
        %s293 = ssub.s32 %s22, 1
        %s294 = sand.u32 %s49, 1
        %s295 = scalar_lea.sflag [#allocation4], %s294
        %s296 = sand.u32 %s49, 1
        %s297 = smul.addr %s296, 64
        %s298 = scalar_lea.vmem [#allocation3], %s297
        // Predicated region
        $region41: #{tpu_custom_call.1} parent=39 // pred_check
          %p299 = pneg %p62
        $region42: #{tpu_custom_call.1} parent=39 // pred_check_branch
          %301 = sbr.rel (%p299) target = $region44
        $region43: #{tpu_custom_call.1} parent=39 // pred_region
          %302 = dma.done %s295, 1024
        $region44: #{tpu_custom_call.1} parent=39 // pred_fallthru
          _
        %s303 = sand.u32 %s49, 1
        %s304 = scalar_lea.sflag [#allocation4], %s303
        %s305 = sand.u32 %s49, 1
        %s306 = smul.addr %s305, 64
        %s307 = scalar_lea.vmem [#allocation3], %s306
        %p308 = pneg %p62
        %p309 = pneg %p59
        %p310 = scmp.lt.s32.totalorder %s31, 1
        %s311 = scalar_select %p310, %s31, 1
        %p312 = scmp.lt.s32.totalorder %s32, 1
        %s313 = scalar_select %p312, %s32, 1
        %s314 = smul.addr %s311, 2
        %s315 = sadd.s32 %s313, %s314
        %s316 = smul.addr %s315, 8
        %s317 = scalar_lea.vmem %s1, %s316
        %p318 = pneg %p90
        %p319 = pneg %p87
        %p320 = scmp.lt.s32.totalorder %s31, 1
        %s321 = scalar_select %p320, %s31, 1
        %p322 = scmp.lt.s32.totalorder %s32, 1
        %s323 = scalar_select %p322, %s32, 1
        %s324 = smul.addr %s321, 2
        %s325 = sadd.s32 %s323, %s324
        %s326 = smul.addr %s325, 8
        %s327 = scalar_lea.vmem %s2, %s326
        %p328 = pneg %p118
        %p329 = pneg %p115
        %p330 = pneg %p139
        %p331 = pneg %p136
        %p332 = pneg %p160
        %p333 = pneg %p157
        %p334 = pneg %p188
        %p335 = pneg %p185
        %s336 = sand.u32 %s175, 1
        %s337 = scalar_lea.sflag [#allocation5], %s336
        %s338 = sand.u32 %s175, 1
        %s339 = smul.addr %s338, 32
        %s340 = scalar_lea.vmem [#allocation6], %s339
        %p341 = pneg %p216
        %p342 = pneg %p213
        %s343 = sand.u32 %s203, 1
        %s344 = scalar_lea.sflag [#allocation8], %s343
        %s345 = sand.u32 %s203, 1
        %s346 = smul.addr %s345, 2
        %s347 = scalar_lea.vmem [#allocation7], %s346
        %s348 = smul.u32 4, %s32
        %p349 = scmp.lt.s32.totalorder %s31, 1
        %s350 = scalar_select %p349, %s31, 1
        %p351 = scmp.lt.s32.totalorder %s32, 1
        %s352 = scalar_select %p351, %s32, 1
        %s353 = smul.addr %s350, 2
        %s354 = sadd.s32 %s352, %s353
        %s355 = smul.addr %s354, 8
        %s356 = scalar_lea.vmem %s1, %s355
        %p357 = scmp.lt.s32.totalorder %s31, 1
        %s358 = scalar_select %p357, %s31, 1
        %p359 = scmp.lt.s32.totalorder %s32, 1
        %s360 = scalar_select %p359, %s32, 1
        %s361 = smul.addr %s358, 2
        %s362 = sadd.s32 %s360, %s361
        %s363 = smul.addr %s362, 8
        %s364 = scalar_lea.vmem %s2, %s363
        %s365 = smul.u32 4, %s32
        %vm366 = vcmask 24576
        %367 = vst.msk [vmem:[#allocation2] sm:$0x1] %vm366, 0.0
        %368 = vst.msk [vmem:[#allocation2 + $0x10] sm:$0x1] %vm366, 0.0
        %369 = vst.msk [vmem:[#allocation2 + $0x20] sm:$0x1] %vm366, 0.0
        %370 = vst.msk [vmem:[#allocation2 + $0x30] sm:$0x1] %vm366, 0.0
        %371 = vst.msk [vmem:[#allocation2 + $0x40] sm:$0x1] %vm366, 0.0
        %372 = vst.msk [vmem:[#allocation2 + $0x50] sm:$0x1] %vm366, 0.0
        %373 = vst.msk [vmem:[#allocation2 + $0x9] sm:$0x1] %vm366, 0.0
        %374 = vst.msk [vmem:[#allocation2 + $0x19] sm:$0x1] %vm366, 0.0
        %375 = vst.msk [vmem:[#allocation2 + $0x29] sm:$0x1] %vm366, 0.0
        %376 = vst.msk [vmem:[#allocation2 + $0x39] sm:$0x1] %vm366, 0.0
        %377 = vst.msk [vmem:[#allocation2 + $0x49] sm:$0x1] %vm366, 0.0
        %378 = vst.msk [vmem:[#allocation2 + $0x59] sm:$0x1] %vm366, 0.0
        %v379 = vld [vmem:[%s298] sm:$0xff]
        %v380 = vld [vmem:[%s298 + $0x10] sm:$0xff]
        %v381 = vld [vmem:[%s298 + $0x20] sm:$0xff]
        %v382 = vld [vmem:[%s298 + $0x30] sm:$0xff]
        %s383 = scalar_lea.vmem %s298, 8 [#allocation3]
        %v384 = vld [vmem:[%s383] sm:$0xff]
        %v385 = vld [vmem:[%s383 + $0x10] sm:$0xff]
        %v386 = vld [vmem:[%s383 + $0x20] sm:$0xff]
        %v387 = vld [vmem:[%s383 + $0x30] sm:$0xff]
        %v388 = vmax.f32 %v379, %v384
        %v389 = vmax.f32 %v380, %v385
        %v390 = vmax.f32 %v381, %v386
        %v391 = vmax.f32 %v382, %v387
        %396 = vrot.lane.b32.xlu0 %v388, 124
        %v397 = vpop.permute.xlu0 %396
        %398 = vrot.lane.b32.xlu0 %v389, 124
        %v399 = vpop.permute.xlu0 %398
        %400 = vrot.lane.b32.xlu0 %v390, 124
        %v401 = vpop.permute.xlu0 %400
        %402 = vrot.lane.b32.xlu0 %v391, 124
        %v403 = vpop.permute.xlu0 %402
        %v408 = vmax.f32 %v388, %v397
        %v409 = vmax.f32 %v389, %v399
        %v410 = vmax.f32 %v390, %v401
        %v411 = vmax.f32 %v391, %v403
        %s412 = scalar_lea.vmem [#allocation2], 16
        %vm413 = vcmask 31744
        %414 = vst.msk [vmem:[%s412 + $0x1] sm:$0xff] %vm413, %v408
        %415 = vst.msk [vmem:[%s412 + $0x11] sm:$0xff] %vm413, %v409
        %416 = vst.msk [vmem:[%s412 + $0x21] sm:$0xff] %vm413, %v410
        %417 = vst.msk [vmem:[%s412 + $0x31] sm:$0xff] %vm413, %v411
        %v418 = vld [vmem:[%s356] sm:$0xff]
        %419 = vst.msk [vmem:[#allocation2 + $0x1] sm:$0xff] %vm413, %v418
        %v420 = vld [vmem:[%s364] sm:$0xff]
        %s421 = scalar_lea.vmem [#allocation2], 80
        %422 = vst.msk [vmem:[%s421 + $0x1] sm:$0xff] %vm413, %v420
        %v423 = vld [vmem:[#allocation2] sm:$0xff]
        %v424 = vld [vmem:[#allocation2 + $0x10] sm:$0xff]
        %v425 = vld [vmem:[#allocation2 + $0x20] sm:$0xff]
        %v426 = vld [vmem:[#allocation2 + $0x30] sm:$0xff]
        %v427 = vld [vmem:[%s3] sm:$0xf]
        %v428 = vld [vmem:[#allocation2 + $0x1] sm:$0xff]
        %v429 = vld [vmem:[#allocation2 + $0x11] sm:$0xff]
        %v430 = vld [vmem:[#allocation2 + $0x21] sm:$0xff]
        %v431 = vld [vmem:[#allocation2 + $0x31] sm:$0xff]
        %s432 = scalar_lea.vmem %s3, 4
        %v433 = vld [vmem:[%s432] sm:$0xf]
        %v435 = vsel %vm413, %v428, 0
        %v438 = vsel %vm413, %v429, 0
        %v441 = vsel %vm413, %v430, 0
        %v444 = vsel %vm413, %v431, 0
        %vm446 = vcmask 1043456
        %v448 = vsel %vm446, %v433, 0
        %450 = vmatprep.subr.mxu0 0.0
        %451 = vmatpush1.msra.mxu0 0.0
        %452 = vmatprep.subr.mxu0 0.0
        %453 = vmatpush1.msra.mxu0 0.0
        %454 = vmatprep.subr.mxu0 0.0
        %455 = vmatpush1.msra.mxu0 0.0
        %456 = vmatprep.subr.mxu0 0.0
        %457 = vmatpush1.msra.mxu0 0.0
        %458 = vmatprep.subr.mxu0 0.0
        %459 = vmatpush1.msra.mxu0 0.0
        %460 = vmatprep.subr.mxu0 0.0
        %461 = vmatpush1.msra.mxu0 0.0
        %462 = vmatprep.subr.mxu0 0.0
        %463 = vmatpush1.msra.mxu0 0.0
        %464 = vmatprep.subr.mxu0 0.0
        %465 = vmatpush1.msra.mxu0 0.0
        %466 = vmatprep.subr.mxu0 0.0
        %467 = vmatpush1.msra.mxu0 0.0
        %468 = vmatprep.subr.mxu0 0.0
        %469 = vmatpush1.msra.mxu0 0.0
        %470 = vmatprep.subr.mxu0 0.0
        %471 = vmatpush1.msra.mxu0 0.0
        %472 = vmatprep.subr.mxu0 0.0
        %473 = vmatpush1.msra.mxu0 0.0
        %474 = vmatprep.subr.mxu0 0.0
        %475 = vmatpush1.msra.mxu0 0.0
        %476 = vmatprep.subr.mxu0 0.0
        %477 = vmatpush1.msra.mxu0 0.0
        %478 = vmatprep.subr.mxu0 0.0
        %479 = vmatpush1.msra.mxu0 0.0
        %480 = vmatprep.subr.mxu0 0.0
        %481 = vmatpush1.msra.mxu0 %v448
        %482 = vmatprep.subr.mxu0 0.0
        %483 = vmatpush2.msra.mxu0 0.0
        %484 = vmatprep.subr.mxu0 0.0
        %485 = vmatpush2.msra.mxu0 0.0
        %486 = vmatprep.subr.mxu0 0.0
        %487 = vmatpush2.msra.mxu0 0.0
        %488 = vmatprep.subr.mxu0 0.0
        %489 = vmatpush2.msra.mxu0 0.0
        %490 = vmatprep.subr.mxu0 0.0
        %491 = vmatpush2.msra.mxu0 0.0
        %492 = vmatprep.subr.mxu0 0.0
        %493 = vmatpush2.msra.mxu0 0.0
        %494 = vmatprep.subr.mxu0 0.0
        %495 = vmatpush2.msra.mxu0 0.0
        %496 = vmatprep.subr.mxu0 0.0
        %497 = vmatpush2.msra.mxu0 0.0
        %498 = vmatprep.subr.mxu0 0.0
        %499 = vmatpush2.msra.mxu0 0.0
        %500 = vmatprep.subr.mxu0 0.0
        %501 = vmatpush2.msra.mxu0 0.0
        %502 = vmatprep.subr.mxu0 0.0
        %503 = vmatpush2.msra.mxu0 0.0
        %504 = vmatprep.subr.mxu0 0.0
        %505 = vmatpush2.msra.mxu0 0.0
        %506 = vmatprep.subr.mxu0 0.0
        %507 = vmatpush2.msra.mxu0 0.0
        %508 = vmatprep.subr.mxu0 0.0
        %509 = vmatpush2.msra.mxu0 0.0
        %510 = vmatprep.subr.mxu0 0.0
        %511 = vmatpush2.msra.mxu0 0.0
        %512 = vmatprep.subr.mxu0 0.0
        %513 = vmatpush2.msra.mxu0 0.0
        %514 = vmatprep.mubr.f32.mxu0 0.0
        %515 = vmatmul.mubr.f32.gmra.mxu0 %v435
        %v516 = vpop.f32.mrf.mxu0
        %v517 = vadd.f32 0.0, %v516
        %v518 = vpop.f32.mrf.mxu0
        %519 = vmatprep.mubr.f32.mxu0 0.0
        %520 = vmatmul.mubr.f32.gmra.mxu0 %v438
        %v521 = vpop.f32.mrf.mxu0
        %v522 = vadd.f32 0.0, %v521
        %v523 = vpop.f32.mrf.mxu0
        %524 = vmatprep.mubr.f32.mxu0 0.0
        %525 = vmatmul.mubr.f32.gmra.mxu0 %v441
        %v526 = vpop.f32.mrf.mxu0
        %v527 = vadd.f32 0.0, %v526
        %v528 = vpop.f32.mrf.mxu0
        %529 = vmatprep.mubr.f32.mxu0 0.0
        %530 = vmatmul.mubr.f32.gmra.mxu0 %v444
        %v531 = vpop.f32.mrf.mxu0
        %v532 = vadd.f32 0.0, %v531
        %v533 = vpop.f32.mrf.mxu0
        %534 = vdwg.mxu0
        %v536 = vsel %vm413, %v423, 0
        %v539 = vsel %vm413, %v424, 0
        %v542 = vsel %vm413, %v425, 0
        %v545 = vsel %vm413, %v426, 0
        %v548 = vsel %vm446, %v427, 0
        %550 = vmatprep.subr.mxu0 0.0
        %551 = vmatpush1.msra.mxu0 0.0
        %552 = vmatprep.subr.mxu0 0.0
        %553 = vmatpush1.msra.mxu0 0.0
        %554 = vmatprep.subr.mxu0 0.0
        %555 = vmatpush1.msra.mxu0 0.0
        %556 = vmatprep.subr.mxu0 0.0
        %557 = vmatpush1.msra.mxu0 0.0
        %558 = vmatprep.subr.mxu0 0.0
        %559 = vmatpush1.msra.mxu0 0.0
        %560 = vmatprep.subr.mxu0 0.0
        %561 = vmatpush1.msra.mxu0 0.0
        %562 = vmatprep.subr.mxu0 0.0
        %563 = vmatpush1.msra.mxu0 0.0
        %564 = vmatprep.subr.mxu0 0.0
        %565 = vmatpush1.msra.mxu0 0.0
        %566 = vmatprep.subr.mxu0 0.0
        %567 = vmatpush1.msra.mxu0 0.0
        %568 = vmatprep.subr.mxu0 0.0
        %569 = vmatpush1.msra.mxu0 0.0
        %570 = vmatprep.subr.mxu0 0.0
        %571 = vmatpush1.msra.mxu0 0.0
        %572 = vmatprep.subr.mxu0 0.0
        %573 = vmatpush1.msra.mxu0 0.0
        %574 = vmatprep.subr.mxu0 0.0
        %575 = vmatpush1.msra.mxu0 0.0
        %576 = vmatprep.subr.mxu0 0.0
        %577 = vmatpush1.msra.mxu0 0.0
        %578 = vmatprep.subr.mxu0 0.0
        %579 = vmatpush1.msra.mxu0 0.0
        %580 = vmatprep.subr.mxu0 0.0
        %581 = vmatpush1.msra.mxu0 %v548
        %582 = vmatprep.subr.mxu0 0.0
        %583 = vmatpush2.msra.mxu0 0.0
        %584 = vmatprep.subr.mxu0 0.0
        %585 = vmatpush2.msra.mxu0 0.0
        %586 = vmatprep.subr.mxu0 0.0
        %587 = vmatpush2.msra.mxu0 0.0
        %588 = vmatprep.subr.mxu0 0.0
        %589 = vmatpush2.msra.mxu0 0.0
        %590 = vmatprep.subr.mxu0 0.0
        %591 = vmatpush2.msra.mxu0 0.0
        %592 = vmatprep.subr.mxu0 0.0
        %593 = vmatpush2.msra.mxu0 0.0
        %594 = vmatprep.subr.mxu0 0.0
        %595 = vmatpush2.msra.mxu0 0.0
        %596 = vmatprep.subr.mxu0 0.0
        %597 = vmatpush2.msra.mxu0 0.0
        %598 = vmatprep.subr.mxu0 0.0
        %599 = vmatpush2.msra.mxu0 0.0
        %600 = vmatprep.subr.mxu0 0.0
        %601 = vmatpush2.msra.mxu0 0.0
        %602 = vmatprep.subr.mxu0 0.0
        %603 = vmatpush2.msra.mxu0 0.0
        %604 = vmatprep.subr.mxu0 0.0
        %605 = vmatpush2.msra.mxu0 0.0
        %606 = vmatprep.subr.mxu0 0.0
        %607 = vmatpush2.msra.mxu0 0.0
        %608 = vmatprep.subr.mxu0 0.0
        %609 = vmatpush2.msra.mxu0 0.0
        %610 = vmatprep.subr.mxu0 0.0
        %611 = vmatpush2.msra.mxu0 0.0
        %612 = vmatprep.subr.mxu0 0.0
        %613 = vmatpush2.msra.mxu0 0.0
        %614 = vmatprep.mubr.f32.mxu0 0.0
        %615 = vmatmul.mubr.f32.gmra.mxu0 %v536
        %v616 = vpop.f32.mrf.mxu0
        %v617 = vadd.f32 %v517, %v616
        %v618 = vpop.f32.mrf.mxu0
        %619 = vmatprep.mubr.f32.mxu0 0.0
        %620 = vmatmul.mubr.f32.gmra.mxu0 %v539
        %v621 = vpop.f32.mrf.mxu0
        %v622 = vadd.f32 %v522, %v621
        %v623 = vpop.f32.mrf.mxu0
        %624 = vmatprep.mubr.f32.mxu0 0.0
        %625 = vmatmul.mubr.f32.gmra.mxu0 %v542
        %v626 = vpop.f32.mrf.mxu0
        %v627 = vadd.f32 %v527, %v626
        %v628 = vpop.f32.mrf.mxu0
        %629 = vmatprep.mubr.f32.mxu0 0.0
        %630 = vmatmul.mubr.f32.gmra.mxu0 %v545
        %v631 = vpop.f32.mrf.mxu0
        %v632 = vadd.f32 %v532, %v631
        %v633 = vpop.f32.mrf.mxu0
        %634 = vdwg.mxu0
        %v635 = vld [vmem:[#allocation2 + $0x2] sm:$0xff]
        %v636 = vld [vmem:[#allocation2 + $0x12] sm:$0xff]
        %v637 = vld [vmem:[#allocation2 + $0x22] sm:$0xff]
        %v638 = vld [vmem:[#allocation2 + $0x32] sm:$0xff]
        %s639 = scalar_lea.vmem %s3, 8
        %v640 = vld [vmem:[%s639] sm:$0xf]
        %v642 = vsel %vm413, %v635, 0
        %v645 = vsel %vm413, %v636, 0
        %v648 = vsel %vm413, %v637, 0
        %v651 = vsel %vm413, %v638, 0
        %v654 = vsel %vm446, %v640, 0
        %656 = vmatprep.subr.mxu0 0.0
        %657 = vmatpush1.msra.mxu0 0.0
        %658 = vmatprep.subr.mxu0 0.0
        %659 = vmatpush1.msra.mxu0 0.0
        %660 = vmatprep.subr.mxu0 0.0
        %661 = vmatpush1.msra.mxu0 0.0
        %662 = vmatprep.subr.mxu0 0.0
        %663 = vmatpush1.msra.mxu0 0.0
        %664 = vmatprep.subr.mxu0 0.0
        %665 = vmatpush1.msra.mxu0 0.0
        %666 = vmatprep.subr.mxu0 0.0
        %667 = vmatpush1.msra.mxu0 0.0
        %668 = vmatprep.subr.mxu0 0.0
        %669 = vmatpush1.msra.mxu0 0.0
        %670 = vmatprep.subr.mxu0 0.0
        %671 = vmatpush1.msra.mxu0 0.0
        %672 = vmatprep.subr.mxu0 0.0
        %673 = vmatpush1.msra.mxu0 0.0
        %674 = vmatprep.subr.mxu0 0.0
        %675 = vmatpush1.msra.mxu0 0.0
        %676 = vmatprep.subr.mxu0 0.0
        %677 = vmatpush1.msra.mxu0 0.0
        %678 = vmatprep.subr.mxu0 0.0
        %679 = vmatpush1.msra.mxu0 0.0
        %680 = vmatprep.subr.mxu0 0.0
        %681 = vmatpush1.msra.mxu0 0.0
        %682 = vmatprep.subr.mxu0 0.0
        %683 = vmatpush1.msra.mxu0 0.0
        %684 = vmatprep.subr.mxu0 0.0
        %685 = vmatpush1.msra.mxu0 0.0
        %686 = vmatprep.subr.mxu0 0.0
        %687 = vmatpush1.msra.mxu0 %v654
        %688 = vmatprep.subr.mxu0 0.0
        %689 = vmatpush2.msra.mxu0 0.0
        %690 = vmatprep.subr.mxu0 0.0
        %691 = vmatpush2.msra.mxu0 0.0
        %692 = vmatprep.subr.mxu0 0.0
        %693 = vmatpush2.msra.mxu0 0.0
        %694 = vmatprep.subr.mxu0 0.0
        %695 = vmatpush2.msra.mxu0 0.0
        %696 = vmatprep.subr.mxu0 0.0
        %697 = vmatpush2.msra.mxu0 0.0
        %698 = vmatprep.subr.mxu0 0.0
        %699 = vmatpush2.msra.mxu0 0.0
        %700 = vmatprep.subr.mxu0 0.0
        %701 = vmatpush2.msra.mxu0 0.0
        %702 = vmatprep.subr.mxu0 0.0
        %703 = vmatpush2.msra.mxu0 0.0
        %704 = vmatprep.subr.mxu0 0.0
        %705 = vmatpush2.msra.mxu0 0.0
        %706 = vmatprep.subr.mxu0 0.0
        %707 = vmatpush2.msra.mxu0 0.0
        %708 = vmatprep.subr.mxu0 0.0
        %709 = vmatpush2.msra.mxu0 0.0
        %710 = vmatprep.subr.mxu0 0.0
        %711 = vmatpush2.msra.mxu0 0.0
        %712 = vmatprep.subr.mxu0 0.0
        %713 = vmatpush2.msra.mxu0 0.0
        %714 = vmatprep.subr.mxu0 0.0
        %715 = vmatpush2.msra.mxu0 0.0
        %716 = vmatprep.subr.mxu0 0.0
        %717 = vmatpush2.msra.mxu0 0.0
        %718 = vmatprep.subr.mxu0 0.0
        %719 = vmatpush2.msra.mxu0 0.0
        %720 = vmatprep.mubr.f32.mxu0 0.0
        %721 = vmatmul.mubr.f32.gmra.mxu0 %v642
        %v722 = vpop.f32.mrf.mxu0
        %v723 = vadd.f32 0.0, %v722
        %v724 = vpop.f32.mrf.mxu0
        %725 = vmatprep.mubr.f32.mxu0 0.0
        %726 = vmatmul.mubr.f32.gmra.mxu0 %v645
        %v727 = vpop.f32.mrf.mxu0
        %v728 = vadd.f32 0.0, %v727
        %v729 = vpop.f32.mrf.mxu0
        %730 = vmatprep.mubr.f32.mxu0 0.0
        %731 = vmatmul.mubr.f32.gmra.mxu0 %v648
        %v732 = vpop.f32.mrf.mxu0
        %v733 = vadd.f32 0.0, %v732
        %v734 = vpop.f32.mrf.mxu0
        %735 = vmatprep.mubr.f32.mxu0 0.0
        %736 = vmatmul.mubr.f32.gmra.mxu0 %v651
        %v737 = vpop.f32.mrf.mxu0
        %v738 = vadd.f32 0.0, %v737
        %v739 = vpop.f32.mrf.mxu0
        %740 = vdwg.mxu0
        %v741 = vadd.f32 %v617, %v723
        %v742 = vadd.f32 %v622, %v728
        %v743 = vadd.f32 %v627, %v733
        %v744 = vadd.f32 %v632, %v738
        %v745 = vld [vmem:[%s412] sm:$0xff]
        %v746 = vld [vmem:[%s412 + $0x10] sm:$0xff]
        %v747 = vld [vmem:[%s412 + $0x20] sm:$0xff]
        %v748 = vld [vmem:[%s412 + $0x30] sm:$0xff]
        %s749 = scalar_lea.vmem %s3, 12
        %v750 = vld [vmem:[%s749] sm:$0xf]
        %v752 = vsel %vm413, %v745, 0
        %v755 = vsel %vm413, %v746, 0
        %v758 = vsel %vm413, %v747, 0
        %v761 = vsel %vm413, %v748, 0
        %v764 = vsel %vm446, %v750, 0
        %766 = vmatprep.subr.mxu0 0.0
        %767 = vmatpush1.msra.mxu0 0.0
        %768 = vmatprep.subr.mxu0 0.0
        %769 = vmatpush1.msra.mxu0 0.0
        %770 = vmatprep.subr.mxu0 0.0
        %771 = vmatpush1.msra.mxu0 0.0
        %772 = vmatprep.subr.mxu0 0.0
        %773 = vmatpush1.msra.mxu0 0.0
        %774 = vmatprep.subr.mxu0 0.0
        %775 = vmatpush1.msra.mxu0 0.0
        %776 = vmatprep.subr.mxu0 0.0
        %777 = vmatpush1.msra.mxu0 0.0
        %778 = vmatprep.subr.mxu0 0.0
        %779 = vmatpush1.msra.mxu0 0.0
        %780 = vmatprep.subr.mxu0 0.0
        %781 = vmatpush1.msra.mxu0 0.0
        %782 = vmatprep.subr.mxu0 0.0
        %783 = vmatpush1.msra.mxu0 0.0
        %784 = vmatprep.subr.mxu0 0.0
        %785 = vmatpush1.msra.mxu0 0.0
        %786 = vmatprep.subr.mxu0 0.0
        %787 = vmatpush1.msra.mxu0 0.0
        %788 = vmatprep.subr.mxu0 0.0
        %789 = vmatpush1.msra.mxu0 0.0
        %790 = vmatprep.subr.mxu0 0.0
        %791 = vmatpush1.msra.mxu0 0.0
        %792 = vmatprep.subr.mxu0 0.0
        %793 = vmatpush1.msra.mxu0 0.0
        %794 = vmatprep.subr.mxu0 0.0
        %795 = vmatpush1.msra.mxu0 0.0
        %796 = vmatprep.subr.mxu0 0.0
        %797 = vmatpush1.msra.mxu0 %v764
        %798 = vmatprep.subr.mxu0 0.0
        %799 = vmatpush2.msra.mxu0 0.0
        %800 = vmatprep.subr.mxu0 0.0
        %801 = vmatpush2.msra.mxu0 0.0
        %802 = vmatprep.subr.mxu0 0.0
        %803 = vmatpush2.msra.mxu0 0.0
        %804 = vmatprep.subr.mxu0 0.0
        %805 = vmatpush2.msra.mxu0 0.0
        %806 = vmatprep.subr.mxu0 0.0
        %807 = vmatpush2.msra.mxu0 0.0
        %808 = vmatprep.subr.mxu0 0.0
        %809 = vmatpush2.msra.mxu0 0.0
        %810 = vmatprep.subr.mxu0 0.0
        %811 = vmatpush2.msra.mxu0 0.0
        %812 = vmatprep.subr.mxu0 0.0
        %813 = vmatpush2.msra.mxu0 0.0
        %814 = vmatprep.subr.mxu0 0.0
        %815 = vmatpush2.msra.mxu0 0.0
        %816 = vmatprep.subr.mxu0 0.0
        %817 = vmatpush2.msra.mxu0 0.0
        %818 = vmatprep.subr.mxu0 0.0
        %819 = vmatpush2.msra.mxu0 0.0
        %820 = vmatprep.subr.mxu0 0.0
        %821 = vmatpush2.msra.mxu0 0.0
        %822 = vmatprep.subr.mxu0 0.0
        %823 = vmatpush2.msra.mxu0 0.0
        %824 = vmatprep.subr.mxu0 0.0
        %825 = vmatpush2.msra.mxu0 0.0
        %826 = vmatprep.subr.mxu0 0.0
        %827 = vmatpush2.msra.mxu0 0.0
        %828 = vmatprep.subr.mxu0 0.0
        %829 = vmatpush2.msra.mxu0 0.0
        %830 = vmatprep.mubr.f32.mxu0 0.0
        %831 = vmatmul.mubr.f32.gmra.mxu0 %v752
        %v832 = vpop.f32.mrf.mxu0
        %v833 = vadd.f32 0.0, %v832
        %v834 = vpop.f32.mrf.mxu0
        %835 = vmatprep.mubr.f32.mxu0 0.0
        %836 = vmatmul.mubr.f32.gmra.mxu0 %v755
        %v837 = vpop.f32.mrf.mxu0
        %v838 = vadd.f32 0.0, %v837
        %v839 = vpop.f32.mrf.mxu0
        %840 = vmatprep.mubr.f32.mxu0 0.0
        %841 = vmatmul.mubr.f32.gmra.mxu0 %v758
        %v842 = vpop.f32.mrf.mxu0
        %v843 = vadd.f32 0.0, %v842
        %v844 = vpop.f32.mrf.mxu0
        %845 = vmatprep.mubr.f32.mxu0 0.0
        %846 = vmatmul.mubr.f32.gmra.mxu0 %v761
        %v847 = vpop.f32.mrf.mxu0
        %v848 = vadd.f32 0.0, %v847
        %v849 = vpop.f32.mrf.mxu0
        %850 = vdwg.mxu0
        %v851 = vadd.f32 %v741, %v833
        %v852 = vadd.f32 %v742, %v838
        %v853 = vadd.f32 %v743, %v843
        %v854 = vadd.f32 %v744, %v848
        %v855 = vld [vmem:[%s412 + $0x1] sm:$0xff]
        %v856 = vld [vmem:[%s412 + $0x11] sm:$0xff]
        %v857 = vld [vmem:[%s412 + $0x21] sm:$0xff]
        %v858 = vld [vmem:[%s412 + $0x31] sm:$0xff]
        %s859 = scalar_lea.vmem %s3, 16
        %v860 = vld [vmem:[%s859] sm:$0xf]
        %v862 = vsel %vm413, %v855, 0
        %v865 = vsel %vm413, %v856, 0
        %v868 = vsel %vm413, %v857, 0
        %v871 = vsel %vm413, %v858, 0
        %v874 = vsel %vm446, %v860, 0
        %876 = vmatprep.subr.mxu0 0.0
        %877 = vmatpush1.msra.mxu0 0.0
        %878 = vmatprep.subr.mxu0 0.0
        %879 = vmatpush1.msra.mxu0 0.0
        %880 = vmatprep.subr.mxu0 0.0
        %881 = vmatpush1.msra.mxu0 0.0
        %882 = vmatprep.subr.mxu0 0.0
        %883 = vmatpush1.msra.mxu0 0.0
        %884 = vmatprep.subr.mxu0 0.0
        %885 = vmatpush1.msra.mxu0 0.0
        %886 = vmatprep.subr.mxu0 0.0
        %887 = vmatpush1.msra.mxu0 0.0
        %888 = vmatprep.subr.mxu0 0.0
        %889 = vmatpush1.msra.mxu0 0.0
        %890 = vmatprep.subr.mxu0 0.0
        %891 = vmatpush1.msra.mxu0 0.0
        %892 = vmatprep.subr.mxu0 0.0
        %893 = vmatpush1.msra.mxu0 0.0
        %894 = vmatprep.subr.mxu0 0.0
        %895 = vmatpush1.msra.mxu0 0.0
        %896 = vmatprep.subr.mxu0 0.0
        %897 = vmatpush1.msra.mxu0 0.0
        %898 = vmatprep.subr.mxu0 0.0
        %899 = vmatpush1.msra.mxu0 0.0
        %900 = vmatprep.subr.mxu0 0.0
        %901 = vmatpush1.msra.mxu0 0.0
        %902 = vmatprep.subr.mxu0 0.0
        %903 = vmatpush1.msra.mxu0 0.0
        %904 = vmatprep.subr.mxu0 0.0
        %905 = vmatpush1.msra.mxu0 0.0
        %906 = vmatprep.subr.mxu0 0.0
        %907 = vmatpush1.msra.mxu0 %v874
        %908 = vmatprep.subr.mxu0 0.0
        %909 = vmatpush2.msra.mxu0 0.0
        %910 = vmatprep.subr.mxu0 0.0
        %911 = vmatpush2.msra.mxu0 0.0
        %912 = vmatprep.subr.mxu0 0.0
        %913 = vmatpush2.msra.mxu0 0.0
        %914 = vmatprep.subr.mxu0 0.0
        %915 = vmatpush2.msra.mxu0 0.0
        %916 = vmatprep.subr.mxu0 0.0
        %917 = vmatpush2.msra.mxu0 0.0
        %918 = vmatprep.subr.mxu0 0.0
        %919 = vmatpush2.msra.mxu0 0.0
        %920 = vmatprep.subr.mxu0 0.0
        %921 = vmatpush2.msra.mxu0 0.0
        %922 = vmatprep.subr.mxu0 0.0
        %923 = vmatpush2.msra.mxu0 0.0
        %924 = vmatprep.subr.mxu0 0.0
        %925 = vmatpush2.msra.mxu0 0.0
        %926 = vmatprep.subr.mxu0 0.0
        %927 = vmatpush2.msra.mxu0 0.0
        %928 = vmatprep.subr.mxu0 0.0
        %929 = vmatpush2.msra.mxu0 0.0
        %930 = vmatprep.subr.mxu0 0.0
        %931 = vmatpush2.msra.mxu0 0.0
        %932 = vmatprep.subr.mxu0 0.0
        %933 = vmatpush2.msra.mxu0 0.0
        %934 = vmatprep.subr.mxu0 0.0
        %935 = vmatpush2.msra.mxu0 0.0
        %936 = vmatprep.subr.mxu0 0.0
        %937 = vmatpush2.msra.mxu0 0.0
        %938 = vmatprep.subr.mxu0 0.0
        %939 = vmatpush2.msra.mxu0 0.0
        %940 = vmatprep.mubr.f32.mxu0 0.0
        %941 = vmatmul.mubr.f32.gmra.mxu0 %v862
        %v942 = vpop.f32.mrf.mxu0
        %v943 = vadd.f32 0.0, %v942
        %v944 = vpop.f32.mrf.mxu0
        %945 = vmatprep.mubr.f32.mxu0 0.0
        %946 = vmatmul.mubr.f32.gmra.mxu0 %v865
        %v947 = vpop.f32.mrf.mxu0
        %v948 = vadd.f32 0.0, %v947
        %v949 = vpop.f32.mrf.mxu0
        %950 = vmatprep.mubr.f32.mxu0 0.0
        %951 = vmatmul.mubr.f32.gmra.mxu0 %v868
        %v952 = vpop.f32.mrf.mxu0
        %v953 = vadd.f32 0.0, %v952
        %v954 = vpop.f32.mrf.mxu0
        %955 = vmatprep.mubr.f32.mxu0 0.0
        %956 = vmatmul.mubr.f32.gmra.mxu0 %v871
        %v957 = vpop.f32.mrf.mxu0
        %v958 = vadd.f32 0.0, %v957
        %v959 = vpop.f32.mrf.mxu0
        %960 = vdwg.mxu0
        %v961 = vadd.f32 %v851, %v943
        %v962 = vadd.f32 %v852, %v948
        %v963 = vadd.f32 %v853, %v953
        %v964 = vadd.f32 %v854, %v958
        %v965 = vld [vmem:[%s412 + $0x2] sm:$0xff]
        %v966 = vld [vmem:[%s412 + $0x12] sm:$0xff]
        %v967 = vld [vmem:[%s412 + $0x22] sm:$0xff]
        %v968 = vld [vmem:[%s412 + $0x32] sm:$0xff]
        %s969 = scalar_lea.vmem %s3, 20
        %v970 = vld [vmem:[%s969] sm:$0xf]
        %v972 = vsel %vm413, %v965, 0
        %v975 = vsel %vm413, %v966, 0
        %v978 = vsel %vm413, %v967, 0
        %v981 = vsel %vm413, %v968, 0
        %v984 = vsel %vm446, %v970, 0
        %986 = vmatprep.subr.mxu0 0.0
        %987 = vmatpush1.msra.mxu0 0.0
        %988 = vmatprep.subr.mxu0 0.0
        %989 = vmatpush1.msra.mxu0 0.0
        %990 = vmatprep.subr.mxu0 0.0
        %991 = vmatpush1.msra.mxu0 0.0
        %992 = vmatprep.subr.mxu0 0.0
        %993 = vmatpush1.msra.mxu0 0.0
        %994 = vmatprep.subr.mxu0 0.0
        %995 = vmatpush1.msra.mxu0 0.0
        %996 = vmatprep.subr.mxu0 0.0
        %997 = vmatpush1.msra.mxu0 0.0
        %998 = vmatprep.subr.mxu0 0.0
        %999 = vmatpush1.msra.mxu0 0.0
        %1000 = vmatprep.subr.mxu0 0.0
        %1001 = vmatpush1.msra.mxu0 0.0
        %1002 = vmatprep.subr.mxu0 0.0
        %1003 = vmatpush1.msra.mxu0 0.0
        %1004 = vmatprep.subr.mxu0 0.0
        %1005 = vmatpush1.msra.mxu0 0.0
        %1006 = vmatprep.subr.mxu0 0.0
        %1007 = vmatpush1.msra.mxu0 0.0
        %1008 = vmatprep.subr.mxu0 0.0
        %1009 = vmatpush1.msra.mxu0 0.0
        %1010 = vmatprep.subr.mxu0 0.0
        %1011 = vmatpush1.msra.mxu0 0.0
        %1012 = vmatprep.subr.mxu0 0.0
        %1013 = vmatpush1.msra.mxu0 0.0
        %1014 = vmatprep.subr.mxu0 0.0
        %1015 = vmatpush1.msra.mxu0 0.0
        %1016 = vmatprep.subr.mxu0 0.0
        %1017 = vmatpush1.msra.mxu0 %v984
        %1018 = vmatprep.subr.mxu0 0.0
        %1019 = vmatpush2.msra.mxu0 0.0
        %1020 = vmatprep.subr.mxu0 0.0
        %1021 = vmatpush2.msra.mxu0 0.0
        %1022 = vmatprep.subr.mxu0 0.0
        %1023 = vmatpush2.msra.mxu0 0.0
        %1024 = vmatprep.subr.mxu0 0.0
        %1025 = vmatpush2.msra.mxu0 0.0
        %1026 = vmatprep.subr.mxu0 0.0
        %1027 = vmatpush2.msra.mxu0 0.0
        %1028 = vmatprep.subr.mxu0 0.0
        %1029 = vmatpush2.msra.mxu0 0.0
        %1030 = vmatprep.subr.mxu0 0.0
        %1031 = vmatpush2.msra.mxu0 0.0
        %1032 = vmatprep.subr.mxu0 0.0
        %1033 = vmatpush2.msra.mxu0 0.0
        %1034 = vmatprep.subr.mxu0 0.0
        %1035 = vmatpush2.msra.mxu0 0.0
        %1036 = vmatprep.subr.mxu0 0.0
        %1037 = vmatpush2.msra.mxu0 0.0
        %1038 = vmatprep.subr.mxu0 0.0
        %1039 = vmatpush2.msra.mxu0 0.0
        %1040 = vmatprep.subr.mxu0 0.0
        %1041 = vmatpush2.msra.mxu0 0.0
        %1042 = vmatprep.subr.mxu0 0.0
        %1043 = vmatpush2.msra.mxu0 0.0
        %1044 = vmatprep.subr.mxu0 0.0
        %1045 = vmatpush2.msra.mxu0 0.0
        %1046 = vmatprep.subr.mxu0 0.0
        %1047 = vmatpush2.msra.mxu0 0.0
        %1048 = vmatprep.subr.mxu0 0.0
        %1049 = vmatpush2.msra.mxu0 0.0
        %1050 = vmatprep.mubr.f32.mxu0 0.0
        %1051 = vmatmul.mubr.f32.gmra.mxu0 %v972
        %v1052 = vpop.f32.mrf.mxu0
        %v1053 = vadd.f32 0.0, %v1052
        %v1054 = vpop.f32.mrf.mxu0
        %1055 = vmatprep.mubr.f32.mxu0 0.0
        %1056 = vmatmul.mubr.f32.gmra.mxu0 %v975
        %v1057 = vpop.f32.mrf.mxu0
        %v1058 = vadd.f32 0.0, %v1057
        %v1059 = vpop.f32.mrf.mxu0
        %1060 = vmatprep.mubr.f32.mxu0 0.0
        %1061 = vmatmul.mubr.f32.gmra.mxu0 %v978
        %v1062 = vpop.f32.mrf.mxu0
        %v1063 = vadd.f32 0.0, %v1062
        %v1064 = vpop.f32.mrf.mxu0
        %1065 = vmatprep.mubr.f32.mxu0 0.0
        %1066 = vmatmul.mubr.f32.gmra.mxu0 %v981
        %v1067 = vpop.f32.mrf.mxu0
        %v1068 = vadd.f32 0.0, %v1067
        %v1069 = vpop.f32.mrf.mxu0
        %1070 = vdwg.mxu0
        %v1071 = vadd.f32 %v961, %v1053
        %v1072 = vadd.f32 %v962, %v1058
        %v1073 = vadd.f32 %v963, %v1063
        %v1074 = vadd.f32 %v964, %v1068
        %s1075 = scalar_lea.vmem [#allocation2], 32
        %v1076 = vld [vmem:[%s1075] sm:$0xff]
        %v1077 = vld [vmem:[%s1075 + $0x10] sm:$0xff]
        %v1078 = vld [vmem:[%s1075 + $0x20] sm:$0xff]
        %v1079 = vld [vmem:[%s1075 + $0x30] sm:$0xff]
        %s1080 = scalar_lea.vmem %s3, 24
        %v1081 = vld [vmem:[%s1080] sm:$0xf]
        %v1083 = vsel %vm413, %v1076, 0
        %v1086 = vsel %vm413, %v1077, 0
        %v1089 = vsel %vm413, %v1078, 0
        %v1092 = vsel %vm413, %v1079, 0
        %v1095 = vsel %vm446, %v1081, 0
        %1097 = vmatprep.subr.mxu0 0.0
        %1098 = vmatpush1.msra.mxu0 0.0
        %1099 = vmatprep.subr.mxu0 0.0
        %1100 = vmatpush1.msra.mxu0 0.0
        %1101 = vmatprep.subr.mxu0 0.0
        %1102 = vmatpush1.msra.mxu0 0.0
        %1103 = vmatprep.subr.mxu0 0.0
        %1104 = vmatpush1.msra.mxu0 0.0
        %1105 = vmatprep.subr.mxu0 0.0
        %1106 = vmatpush1.msra.mxu0 0.0
        %1107 = vmatprep.subr.mxu0 0.0
        %1108 = vmatpush1.msra.mxu0 0.0
        %1109 = vmatprep.subr.mxu0 0.0
        %1110 = vmatpush1.msra.mxu0 0.0
        %1111 = vmatprep.subr.mxu0 0.0
        %1112 = vmatpush1.msra.mxu0 0.0
        %1113 = vmatprep.subr.mxu0 0.0
        %1114 = vmatpush1.msra.mxu0 0.0
        %1115 = vmatprep.subr.mxu0 0.0
        %1116 = vmatpush1.msra.mxu0 0.0
        %1117 = vmatprep.subr.mxu0 0.0
        %1118 = vmatpush1.msra.mxu0 0.0
        %1119 = vmatprep.subr.mxu0 0.0
        %1120 = vmatpush1.msra.mxu0 0.0
        %1121 = vmatprep.subr.mxu0 0.0
        %1122 = vmatpush1.msra.mxu0 0.0
        %1123 = vmatprep.subr.mxu0 0.0
        %1124 = vmatpush1.msra.mxu0 0.0
        %1125 = vmatprep.subr.mxu0 0.0
        %1126 = vmatpush1.msra.mxu0 0.0
        %1127 = vmatprep.subr.mxu0 0.0
        %1128 = vmatpush1.msra.mxu0 %v1095
        %1129 = vmatprep.subr.mxu0 0.0
        %1130 = vmatpush2.msra.mxu0 0.0
        %1131 = vmatprep.subr.mxu0 0.0
        %1132 = vmatpush2.msra.mxu0 0.0
        %1133 = vmatprep.subr.mxu0 0.0
        %1134 = vmatpush2.msra.mxu0 0.0
        %1135 = vmatprep.subr.mxu0 0.0
        %1136 = vmatpush2.msra.mxu0 0.0
        %1137 = vmatprep.subr.mxu0 0.0
        %1138 = vmatpush2.msra.mxu0 0.0
        %1139 = vmatprep.subr.mxu0 0.0
        %1140 = vmatpush2.msra.mxu0 0.0
        %1141 = vmatprep.subr.mxu0 0.0
        %1142 = vmatpush2.msra.mxu0 0.0
        %1143 = vmatprep.subr.mxu0 0.0
        %1144 = vmatpush2.msra.mxu0 0.0
        %1145 = vmatprep.subr.mxu0 0.0
        %1146 = vmatpush2.msra.mxu0 0.0
        %1147 = vmatprep.subr.mxu0 0.0
        %1148 = vmatpush2.msra.mxu0 0.0
        %1149 = vmatprep.subr.mxu0 0.0
        %1150 = vmatpush2.msra.mxu0 0.0
        %1151 = vmatprep.subr.mxu0 0.0
        %1152 = vmatpush2.msra.mxu0 0.0
        %1153 = vmatprep.subr.mxu0 0.0
        %1154 = vmatpush2.msra.mxu0 0.0
        %1155 = vmatprep.subr.mxu0 0.0
        %1156 = vmatpush2.msra.mxu0 0.0
        %1157 = vmatprep.subr.mxu0 0.0
        %1158 = vmatpush2.msra.mxu0 0.0
        %1159 = vmatprep.subr.mxu0 0.0
        %1160 = vmatpush2.msra.mxu0 0.0
        %1161 = vmatprep.mubr.f32.mxu0 0.0
        %1162 = vmatmul.mubr.f32.gmra.mxu0 %v1083
        %v1163 = vpop.f32.mrf.mxu0
        %v1164 = vadd.f32 0.0, %v1163
        %v1165 = vpop.f32.mrf.mxu0
        %1166 = vmatprep.mubr.f32.mxu0 0.0
        %1167 = vmatmul.mubr.f32.gmra.mxu0 %v1086
        %v1168 = vpop.f32.mrf.mxu0
        %v1169 = vadd.f32 0.0, %v1168
        %v1170 = vpop.f32.mrf.mxu0
        %1171 = vmatprep.mubr.f32.mxu0 0.0
        %1172 = vmatmul.mubr.f32.gmra.mxu0 %v1089
        %v1173 = vpop.f32.mrf.mxu0
        %v1174 = vadd.f32 0.0, %v1173
        %v1175 = vpop.f32.mrf.mxu0
        %1176 = vmatprep.mubr.f32.mxu0 0.0
        %1177 = vmatmul.mubr.f32.gmra.mxu0 %v1092
        %v1178 = vpop.f32.mrf.mxu0
        %v1179 = vadd.f32 0.0, %v1178
        %v1180 = vpop.f32.mrf.mxu0
        %1181 = vdwg.mxu0
        %v1182 = vadd.f32 %v1071, %v1164
        %v1183 = vadd.f32 %v1072, %v1169
        %v1184 = vadd.f32 %v1073, %v1174
        %v1185 = vadd.f32 %v1074, %v1179
        %v1186 = vld [vmem:[%s1075 + $0x1] sm:$0xff]
        %v1187 = vld [vmem:[%s1075 + $0x11] sm:$0xff]
        %v1188 = vld [vmem:[%s1075 + $0x21] sm:$0xff]
        %v1189 = vld [vmem:[%s1075 + $0x31] sm:$0xff]
        %s1190 = scalar_lea.vmem %s3, 28
        %v1191 = vld [vmem:[%s1190] sm:$0xf]
        %v1193 = vsel %vm413, %v1186, 0
        %v1196 = vsel %vm413, %v1187, 0
        %v1199 = vsel %vm413, %v1188, 0
        %v1202 = vsel %vm413, %v1189, 0
        %v1205 = vsel %vm446, %v1191, 0
        %1207 = vmatprep.subr.mxu0 0.0
        %1208 = vmatpush1.msra.mxu0 0.0
        %1209 = vmatprep.subr.mxu0 0.0
        %1210 = vmatpush1.msra.mxu0 0.0
        %1211 = vmatprep.subr.mxu0 0.0
        %1212 = vmatpush1.msra.mxu0 0.0
        %1213 = vmatprep.subr.mxu0 0.0
        %1214 = vmatpush1.msra.mxu0 0.0
        %1215 = vmatprep.subr.mxu0 0.0
        %1216 = vmatpush1.msra.mxu0 0.0
        %1217 = vmatprep.subr.mxu0 0.0
        %1218 = vmatpush1.msra.mxu0 0.0
        %1219 = vmatprep.subr.mxu0 0.0
        %1220 = vmatpush1.msra.mxu0 0.0
        %1221 = vmatprep.subr.mxu0 0.0
        %1222 = vmatpush1.msra.mxu0 0.0
        %1223 = vmatprep.subr.mxu0 0.0
        %1224 = vmatpush1.msra.mxu0 0.0
        %1225 = vmatprep.subr.mxu0 0.0
        %1226 = vmatpush1.msra.mxu0 0.0
        %1227 = vmatprep.subr.mxu0 0.0
        %1228 = vmatpush1.msra.mxu0 0.0
        %1229 = vmatprep.subr.mxu0 0.0
        %1230 = vmatpush1.msra.mxu0 0.0
        %1231 = vmatprep.subr.mxu0 0.0
        %1232 = vmatpush1.msra.mxu0 0.0
        %1233 = vmatprep.subr.mxu0 0.0
        %1234 = vmatpush1.msra.mxu0 0.0
        %1235 = vmatprep.subr.mxu0 0.0
        %1236 = vmatpush1.msra.mxu0 0.0
        %1237 = vmatprep.subr.mxu0 0.0
        %1238 = vmatpush1.msra.mxu0 %v1205
        %1239 = vmatprep.subr.mxu0 0.0
        %1240 = vmatpush2.msra.mxu0 0.0
        %1241 = vmatprep.subr.mxu0 0.0
        %1242 = vmatpush2.msra.mxu0 0.0
        %1243 = vmatprep.subr.mxu0 0.0
        %1244 = vmatpush2.msra.mxu0 0.0
        %1245 = vmatprep.subr.mxu0 0.0
        %1246 = vmatpush2.msra.mxu0 0.0
        %1247 = vmatprep.subr.mxu0 0.0
        %1248 = vmatpush2.msra.mxu0 0.0
        %1249 = vmatprep.subr.mxu0 0.0
        %1250 = vmatpush2.msra.mxu0 0.0
        %1251 = vmatprep.subr.mxu0 0.0
        %1252 = vmatpush2.msra.mxu0 0.0
        %1253 = vmatprep.subr.mxu0 0.0
        %1254 = vmatpush2.msra.mxu0 0.0
        %1255 = vmatprep.subr.mxu0 0.0
        %1256 = vmatpush2.msra.mxu0 0.0
        %1257 = vmatprep.subr.mxu0 0.0
        %1258 = vmatpush2.msra.mxu0 0.0
        %1259 = vmatprep.subr.mxu0 0.0
        %1260 = vmatpush2.msra.mxu0 0.0
        %1261 = vmatprep.subr.mxu0 0.0
        %1262 = vmatpush2.msra.mxu0 0.0
        %1263 = vmatprep.subr.mxu0 0.0
        %1264 = vmatpush2.msra.mxu0 0.0
        %1265 = vmatprep.subr.mxu0 0.0
        %1266 = vmatpush2.msra.mxu0 0.0
        %1267 = vmatprep.subr.mxu0 0.0
        %1268 = vmatpush2.msra.mxu0 0.0
        %1269 = vmatprep.subr.mxu0 0.0
        %1270 = vmatpush2.msra.mxu0 0.0
        %1271 = vmatprep.mubr.f32.mxu0 0.0
        %1272 = vmatmul.mubr.f32.gmra.mxu0 %v1193
        %v1273 = vpop.f32.mrf.mxu0
        %v1274 = vadd.f32 0.0, %v1273
        %v1275 = vpop.f32.mrf.mxu0
        %1276 = vmatprep.mubr.f32.mxu0 0.0
        %1277 = vmatmul.mubr.f32.gmra.mxu0 %v1196
        %v1278 = vpop.f32.mrf.mxu0
        %v1279 = vadd.f32 0.0, %v1278
        %v1280 = vpop.f32.mrf.mxu0
        %1281 = vmatprep.mubr.f32.mxu0 0.0
        %1282 = vmatmul.mubr.f32.gmra.mxu0 %v1199
        %v1283 = vpop.f32.mrf.mxu0
        %v1284 = vadd.f32 0.0, %v1283
        %v1285 = vpop.f32.mrf.mxu0
        %1286 = vmatprep.mubr.f32.mxu0 0.0
        %1287 = vmatmul.mubr.f32.gmra.mxu0 %v1202
        %v1288 = vpop.f32.mrf.mxu0
        %v1289 = vadd.f32 0.0, %v1288
        %v1290 = vpop.f32.mrf.mxu0
        %1291 = vdwg.mxu0
        %v1292 = vadd.f32 %v1182, %v1274
        %v1293 = vadd.f32 %v1183, %v1279
        %v1294 = vadd.f32 %v1184, %v1284
        %v1295 = vadd.f32 %v1185, %v1289
        %v1296 = vld [vmem:[%s1075 + $0x2] sm:$0xff]
        %v1297 = vld [vmem:[%s1075 + $0x12] sm:$0xff]
        %v1298 = vld [vmem:[%s1075 + $0x22] sm:$0xff]
        %v1299 = vld [vmem:[%s1075 + $0x32] sm:$0xff]
        %s1300 = scalar_lea.vmem %s3, 32
        %v1301 = vld [vmem:[%s1300] sm:$0xf]
        %v1303 = vsel %vm413, %v1296, 0
        %v1306 = vsel %vm413, %v1297, 0
        %v1309 = vsel %vm413, %v1298, 0
        %v1312 = vsel %vm413, %v1299, 0
        %v1315 = vsel %vm446, %v1301, 0
        %1317 = vmatprep.subr.mxu0 0.0
        %1318 = vmatpush1.msra.mxu0 0.0
        %1319 = vmatprep.subr.mxu0 0.0
        %1320 = vmatpush1.msra.mxu0 0.0
        %1321 = vmatprep.subr.mxu0 0.0
        %1322 = vmatpush1.msra.mxu0 0.0
        %1323 = vmatprep.subr.mxu0 0.0
        %1324 = vmatpush1.msra.mxu0 0.0
        %1325 = vmatprep.subr.mxu0 0.0
        %1326 = vmatpush1.msra.mxu0 0.0
        %1327 = vmatprep.subr.mxu0 0.0
        %1328 = vmatpush1.msra.mxu0 0.0
        %1329 = vmatprep.subr.mxu0 0.0
        %1330 = vmatpush1.msra.mxu0 0.0
        %1331 = vmatprep.subr.mxu0 0.0
        %1332 = vmatpush1.msra.mxu0 0.0
        %1333 = vmatprep.subr.mxu0 0.0
        %1334 = vmatpush1.msra.mxu0 0.0
        %1335 = vmatprep.subr.mxu0 0.0
        %1336 = vmatpush1.msra.mxu0 0.0
        %1337 = vmatprep.subr.mxu0 0.0
        %1338 = vmatpush1.msra.mxu0 0.0
        %1339 = vmatprep.subr.mxu0 0.0
        %1340 = vmatpush1.msra.mxu0 0.0
        %1341 = vmatprep.subr.mxu0 0.0
        %1342 = vmatpush1.msra.mxu0 0.0
        %1343 = vmatprep.subr.mxu0 0.0
        %1344 = vmatpush1.msra.mxu0 0.0
        %1345 = vmatprep.subr.mxu0 0.0
        %1346 = vmatpush1.msra.mxu0 0.0
        %1347 = vmatprep.subr.mxu0 0.0
        %1348 = vmatpush1.msra.mxu0 %v1315
        %1349 = vmatprep.subr.mxu0 0.0
        %1350 = vmatpush2.msra.mxu0 0.0
        %1351 = vmatprep.subr.mxu0 0.0
        %1352 = vmatpush2.msra.mxu0 0.0
        %1353 = vmatprep.subr.mxu0 0.0
        %1354 = vmatpush2.msra.mxu0 0.0
        %1355 = vmatprep.subr.mxu0 0.0
        %1356 = vmatpush2.msra.mxu0 0.0
        %1357 = vmatprep.subr.mxu0 0.0
        %1358 = vmatpush2.msra.mxu0 0.0
        %1359 = vmatprep.subr.mxu0 0.0
        %1360 = vmatpush2.msra.mxu0 0.0
        %1361 = vmatprep.subr.mxu0 0.0
        %1362 = vmatpush2.msra.mxu0 0.0
        %1363 = vmatprep.subr.mxu0 0.0
        %1364 = vmatpush2.msra.mxu0 0.0
        %1365 = vmatprep.subr.mxu0 0.0
        %1366 = vmatpush2.msra.mxu0 0.0
        %1367 = vmatprep.subr.mxu0 0.0
        %1368 = vmatpush2.msra.mxu0 0.0
        %1369 = vmatprep.subr.mxu0 0.0
        %1370 = vmatpush2.msra.mxu0 0.0
        %1371 = vmatprep.subr.mxu0 0.0
        %1372 = vmatpush2.msra.mxu0 0.0
        %1373 = vmatprep.subr.mxu0 0.0
        %1374 = vmatpush2.msra.mxu0 0.0
        %1375 = vmatprep.subr.mxu0 0.0
        %1376 = vmatpush2.msra.mxu0 0.0
        %1377 = vmatprep.subr.mxu0 0.0
        %1378 = vmatpush2.msra.mxu0 0.0
        %1379 = vmatprep.subr.mxu0 0.0
        %1380 = vmatpush2.msra.mxu0 0.0
        %1381 = vmatprep.mubr.f32.mxu0 0.0
        %1382 = vmatmul.mubr.f32.gmra.mxu0 %v1303
        %v1383 = vpop.f32.mrf.mxu0
        %v1384 = vadd.f32 0.0, %v1383
        %v1385 = vpop.f32.mrf.mxu0
        %1386 = vmatprep.mubr.f32.mxu0 0.0
        %1387 = vmatmul.mubr.f32.gmra.mxu0 %v1306
        %v1388 = vpop.f32.mrf.mxu0
        %v1389 = vadd.f32 0.0, %v1388
        %v1390 = vpop.f32.mrf.mxu0
        %1391 = vmatprep.mubr.f32.mxu0 0.0
        %1392 = vmatmul.mubr.f32.gmra.mxu0 %v1309
        %v1393 = vpop.f32.mrf.mxu0
        %v1394 = vadd.f32 0.0, %v1393
        %v1395 = vpop.f32.mrf.mxu0
        %1396 = vmatprep.mubr.f32.mxu0 0.0
        %1397 = vmatmul.mubr.f32.gmra.mxu0 %v1312
        %v1398 = vpop.f32.mrf.mxu0
        %v1399 = vadd.f32 0.0, %v1398
        %v1400 = vpop.f32.mrf.mxu0
        %1401 = vdwg.mxu0
        %v1402 = vadd.f32 %v1292, %v1384
        %v1403 = vadd.f32 %v1293, %v1389
        %v1404 = vadd.f32 %v1294, %v1394
        %v1405 = vadd.f32 %v1295, %v1399
        %v1406 = vld [vmem:[%s4] sm:$0x1]
        %v1408 = vlaneseq
        %v1409 = vshrl.u32 %v1408, 7
        %v1410 = vsub.s32 0, %v1409
        %v1411 = vrot.slane %v1406, %v1410
        %v1413 = vadd.f32 %v1402, %v1411
        %v1414 = vadd.f32 %v1403, %v1411
        %v1415 = vadd.f32 %v1404, %v1411
        %v1416 = vadd.f32 %v1405, %v1411
        %vm1417 = vcmask 64512
        %1418 = vst.msk [vmem:[%s340] sm:$0xff] %vm1417, %v1413
        %1419 = vst.msk [vmem:[%s340 + $0x8] sm:$0xff] %vm1417, %v1414
        %1420 = vst.msk [vmem:[%s340 + $0x10] sm:$0xff] %vm1417, %v1415
        %1421 = vst.msk [vmem:[%s340 + $0x18] sm:$0xff] %vm1417, %v1416
        %v1422 = vsel %vm1417, %v1413, 0.0
        %v1423 = vsel %vm1417, %v1414, 0.0
        %v1424 = vadd.f32 %v1422, %v1423
        %v1425 = vsel %vm1417, %v1415, 0.0
        %v1426 = vadd.f32 %v1424, %v1425
        %v1427 = vsel %vm1417, %v1416, 0.0
        %v1428 = vadd.f32 %v1426, %v1427
        %v1429 = vrot.slane %v1428, 4
        %v1430 = vadd.f32 %v1428, %v1429
        %v1431 = vrot.slane %v1430, 2
        %v1432 = vadd.f32 %v1430, %v1431
        %v1433 = vrot.slane %v1432, 1
        %v1434 = vadd.f32 %v1432, %v1433
        %v1435 = vmul.f32 %v1413, %v1413
        %v1436 = vmul.f32 %v1414, %v1414
        %v1437 = vmul.f32 %v1415, %v1415
        %v1438 = vmul.f32 %v1416, %v1416
        %v1439 = vsel %vm1417, %v1435, 0.0
        %v1440 = vsel %vm1417, %v1436, 0.0
        %v1441 = vadd.f32 %v1439, %v1440
        %v1442 = vsel %vm1417, %v1437, 0.0
        %v1443 = vadd.f32 %v1441, %v1442
        %v1444 = vsel %vm1417, %v1438, 0.0
        %v1445 = vadd.f32 %v1443, %v1444
        %v1446 = vrot.slane %v1445, 4
        %v1447 = vadd.f32 %v1445, %v1446
        %v1448 = vrot.slane %v1447, 2
        %v1449 = vadd.f32 %v1447, %v1448
        %v1450 = vrot.slane %v1449, 1
        %v1451 = vadd.f32 %v1449, %v1450
        %vm1452 = vcmask 1040384
        %v1453 = vsel %vm1452, %v1434, %v1451
        %vm1454 = vcmask 58368
        %1455 = vst.msk [vmem:[%s347] sm:$0x3] %vm1454, %v1453
        %s1456 = sand.u32 %s175, 1
        %s1457 = scalar_lea.sflag [#allocation5], %s1456
        %s1458 = sand.u32 %s175, 1
        %s1459 = smul.addr %s1458, 32
        %s1460 = scalar_lea.vmem [#allocation6], %s1459
        %s1461 = sand.u32 %s203, 1
        %s1462 = scalar_lea.sflag [#allocation8], %s1461
        %s1463 = sand.u32 %s203, 1
        %s1464 = smul.addr %s1463, 2
        %s1465 = scalar_lea.vmem [#allocation7], %s1464
        // Predicated region
        $region45: #{tpu_custom_call.1} parent=39 // pred_check
          %p1466 = pneg %p185
        $region46: #{tpu_custom_call.1} parent=39 // pred_check_branch
          %1468 = sbr.rel (%p1466) target = $region48
        $region47: #{tpu_custom_call.1} parent=39 // pred_region
          %s1469 = smul.u32 4, %s32
          %s1471 = ssub.s32 512, 512
          %1472 = vsyncadd %s1457, %s1471
          %s1473 = smul.addr %s31, 8
          %s1474 = sadd.s32 %s1469, %s1473
          %s1475 = smul.addr %s1474, 128
          %s1476 = scalar_lea.hbm %s5, %s1475
          %s1477 = sshll.u32 %s1460, 4
          %s1478 = int_to_ptr.vmem [resolvable:$true] %s1477
          %1483 = dma.vmem_to_hbm [thread:$0]  %s1478, 512, %s1476, %s1457, 128, 128, 8
        $region48: #{tpu_custom_call.1} parent=39 // pred_fallthru
          _
        // Predicated region
        $region49: #{tpu_custom_call.1} parent=39 // pred_check
          %p1484 = pneg %p213
        $region50: #{tpu_custom_call.1} parent=39 // pred_check_branch
          %1486 = sbr.rel (%p1484) target = $region52
        $region51: #{tpu_custom_call.1} parent=39 // pred_region
          %s1488 = ssub.s32 32, 32
          %1489 = vsyncadd %s1462, %s1488
          %s1490 = smul.addr %s31, 2
          %s1491 = sadd.s32 %s32, %s1490
          %s1492 = smul.addr %s1491, 32
          %s1493 = scalar_lea.hbm %s6, %s1492
          %s1495 = sshll.u32 %s1465, 4
          %s1496 = int_to_ptr.vmem [resolvable:$true] %s1495
          %1498 = dma.vmem_to_hbm [thread:$0]  %s1496, 32, %s1493, %s1462
        $region52: #{tpu_custom_call.1} parent=39 // pred_fallthru
          _
      $region40: #{tpu_custom_call.1} parent=5 // pred_fallthru
        _
      %p1499 = scmp.le.s32.totalorder 2, %s22
      // Predicated region
      $region53: #{tpu_custom_call.1} parent=5 // pred_check
        %p1500 = pneg %p1499
      $region54: #{tpu_custom_call.1} parent=5 // pred_check_branch
        %1502 = sbr.rel (%p1500) target = $region56
      $region55: #{tpu_custom_call.1} parent=5 // pred_region
        %s1503 = ssub.s32 %s22, 2
        // Predicated region
        $region57: #{tpu_custom_call.1} parent=55 // pred_check
          %p1504 = pneg %p191
        $region58: #{tpu_custom_call.1} parent=55 // pred_check_branch
          %1506 = sbr.rel (%p1504) target = $region60
        $region59: #{tpu_custom_call.1} parent=55 // pred_region
          %s1507 = sand.u32 %s176, 1
          %s1508 = scalar_lea.sflag [#allocation5], %s1507
          %s1509 = sand.u32 %s176, 1
          %s1510 = smul.addr %s1509, 32
          %s1511 = scalar_lea.vmem [#allocation6], %s1510
          %1512 = dma.done %s1508, 512
        $region60: #{tpu_custom_call.1} parent=55 // pred_fallthru
          _
        // Predicated region
        $region61: #{tpu_custom_call.1} parent=55 // pred_check
          %p1513 = pneg %p219
        $region62: #{tpu_custom_call.1} parent=55 // pred_check_branch
          %1515 = sbr.rel (%p1513) target = $region64
        $region63: #{tpu_custom_call.1} parent=55 // pred_region
          %s1516 = sand.u32 %s204, 1
          %s1517 = scalar_lea.sflag [#allocation8], %s1516
          %s1518 = sand.u32 %s204, 1
          %s1519 = smul.addr %s1518, 2
          %s1520 = scalar_lea.vmem [#allocation7], %s1519
          %1521 = dma.done %s1517, 32
        $region64: #{tpu_custom_call.1} parent=55 // pred_fallthru
          _
      $region56: #{tpu_custom_call.1} parent=5 // pred_fallthru
        _
    $region6: #{tpu_custom_call.1} parent=1 // loop_footer
      %s26 = sadd.s32 1, %s22
    $region7: #{tpu_custom_call.1} parent=1 // loop_footer_branch
      %21 = sbr.rel target = $region3
    $region8: #{tpu_custom_call.1} parent=1 // loop_exit
      _
    %1522 = vsyncpa [#allocation4], 1
    %s1523 = scalar_lea.sflag [#allocation4], 1
    %1524 = vsyncpa %s1523, 1
    %1525 = vsyncpa [#allocation5], 1
    %s1526 = scalar_lea.sflag [#allocation5], 1
    %1527 = vsyncpa %s1526, 1
    %1528 = vsyncpa [#allocation8], 1
    %s1529 = scalar_lea.sflag [#allocation8], 1
    %1530 = vsyncpa %s1529, 1

</llo_original>
